<compile_context>
chip_gen: v5e
topology: v5e:2x2
jax: 0.10.0
libtpu: 0.0.40
codegen_flags: <defaults>
</compile_context>

<pallas_src>
import jax
import jax.numpy as jnp
from jax.experimental import pallas as pl
from jax.experimental.pallas import tpu as pltpu

L_IN = 40          # input length: 40 -> conv1 38 -> pool 19 -> conv2 17 -> pool 8 (= 64*8 flatten)
C = 64
K1 = 3
T1 = L_IN - 2      # 38
P1 = T1 // 2       # 19 pooled conv1 rows
T2 = P1 - 2        # 17
P2 = T2 // 2       # 8  (floor pooling drops conv2 output row 16, like PyTorch MaxPool1d(2))
P1U = 2 * P2 + 2   # 18 pooled conv1 rows actually consumed by the kept conv2 rows


def speaker_kernel(x_ref, w1_ref, b1_ref, w2_ref, b2_ref,
                   fc1w_ref, fc1b_ref, fc2w_ref, fc2b_ref,
                   out_ref, p1_ref):
    BT = x_ref.shape[0]

    x = x_ref[...]                                   # (BT, 40) f32, time on lanes
    b1 = b1_ref[...]                                 # (1, 64)
    w1 = [w1_ref[k] for k in range(K1)]              # each (1, 64)

    # Memoized lane-broadcast of x columns: each column is built once, near first use.
    xb_cache = {}

    def xb(i):
        if i not in xb_cache:
            xb_cache[i] = jnp.broadcast_to(x[:, i:i + 1], (BT, C))
        return xb_cache[i]

    def pooled_row(j):
        # relu(max(h1[2j], h1[2j+1]) + b1),  h1[t] = sum_k x[:, t+k] * w1[k]
        e = xb(2 * j) * w1[0] + xb(2 * j + 1) * w1[1] + xb(2 * j + 2) * w1[2]
        o = xb(2 * j + 1) * w1[0] + xb(2 * j + 2) * w1[1] + xb(2 * j + 3) * w1[2]
        return jnp.maximum(jnp.maximum(e, o) + b1, 0.0)     # (BT, 64) f32

    # ---- conv1 (1 -> 64, k=3) + ReLU + maxpool1(2), fused; flat bf16 staging --------------
    # p1 layout: lane index = row*64 + channel; rows written as 128-lane-aligned pairs.
    for m in range(P1U // 2):                                # 9 aligned pair stores
        pair = jnp.concatenate([pooled_row(2 * m), pooled_row(2 * m + 1)], axis=1)
        p1_ref[:, m * 2 * C:(m + 1) * 2 * C] = pair.astype(jnp.bfloat16)

    # ---- conv2 (64 -> 64, k=3) + ReLU + maxpool2(2) + fc1 tap, fused -----------------------
    # One (BT,256)x(256,128) bf16 matmul per pooled row yields [a_even | a_odd] at once.
    w2b = w2_ref[...]                                # (256, 128) bf16, stacked/zero-padded taps
    b2 = b2_ref[...]                                 # (1, 128) = [b2 | b2]
    acc1 = jnp.zeros((BT, C), jnp.float32)

    for j in range(P2):
        win = p1_ref[:, j * 2 * C: j * 2 * C + 4 * C]        # (BT, 256) bf16, 128-aligned
        res = jnp.dot(win, w2b, preferred_element_type=jnp.float32)   # (BT, 128) f32
        res = jnp.maximum(res + b2, 0.0)
        p2j = jnp.maximum(res[:, :C], res[:, C:])                      # (BT, 64) pooled
        acc1 = acc1 + jnp.dot(p2j.astype(jnp.bfloat16), fc1w_ref[j],
                              preferred_element_type=jnp.float32)

    # ---- fc1 bias + ReLU, fc2 + sigmoid (all f32) -------------------------------------------
    z1 = jnp.maximum(acc1 + fc1b_ref[...], 0.0)                               # (BT, 64)
    z2 = jnp.sum(z1 * fc2w_ref[...], axis=-1, keepdims=True) + fc2b_ref[...]  # (BT, 1)
    out_ref[...] = 1.0 / (1.0 + jnp.exp(-z2))


def init_params(key):
    """Deterministic synthetic params, PyTorch default-init style (uniform +-1/sqrt(fan_in))."""
    ks = jax.random.split(key, 8)

    def u(k, shape, fan_in):
        bound = float(fan_in) ** -0.5
        return jax.random.uniform(k, shape, jnp.float32, -bound, bound)

    return dict(
        conv1_w=u(ks[0], (64, 1, 3), 3),          # torch Conv1d(1, 64, 3).weight
        conv1_b=u(ks[1], (64,), 3),
        conv2_w=u(ks[2], (64, 64, 3), 64 * 3),    # torch Conv1d(64, 64, 3).weight
        conv2_b=u(ks[3], (64,), 64 * 3),
        fc1_w=u(ks[4], (64, 64 * 8), 64 * 8),     # torch Linear(512, 64).weight
        fc1_b=u(ks[5], (64,), 64 * 8),
        fc2_w=u(ks[6], (1, 64), 64),              # torch Linear(64, 1).weight
        fc2_b=u(ks[7], (1,), 64),
    )


def speaker_forward_pallas(x, params, *, block_b=256):
    B, L = x.shape
    assert L == L_IN, "sequence length must be 40 so that the 64*8 flatten matches"
    x = x.astype(jnp.float32)                                           # dense (B, L)

    BT = min(block_b, B)                                                # batch tile
    grid = (pl.cdiv(B, BT),)

    # conv1 weights: (out, in=1, k) -> (k, 1, out)
    w1 = jnp.transpose(params["conv1_w"], (2, 1, 0)).astype(jnp.float32)     # (3, 1, 64)
    b1 = params["conv1_b"][None, :].astype(jnp.float32)                      # (1, 64)

    # conv2 weights: (out, in, k) -> (k, in, out), then stack taps for the fused window matmul:
    #   rows  0:192 of the even half = [w2[0]; w2[1]; w2[2]], rows 192:256 = 0
    #   rows 64:256 of the odd  half = [w2[0]; w2[1]; w2[2]], rows   0:64  = 0
    w2k = jnp.transpose(params["conv2_w"], (2, 1, 0)).astype(jnp.float32)    # (3, 64, 64)
    zero = jnp.zeros((C, C), jnp.float32)
    w2_even = jnp.concatenate([w2k[0], w2k[1], w2k[2], zero], axis=0)        # (256, 64)
    w2_odd = jnp.concatenate([zero, w2k[0], w2k[1], w2k[2]], axis=0)         # (256, 64)
    w2_big = jnp.concatenate([w2_even, w2_odd], axis=1).astype(jnp.bfloat16)  # (256, 128)
    b2c = params["conv2_b"].astype(jnp.float32)
    b2_2 = jnp.concatenate([b2c, b2c])[None, :]                              # (1, 128)

    # PyTorch flattens (B, 64, 8) channel-major: in_index = c*8 + t  ->  (t, c_in, c_out).
    fc1w = jnp.transpose(params["fc1_w"].reshape(C, C, P2), (2, 1, 0)).astype(jnp.bfloat16)
    fc1b = params["fc1_b"][None, :].astype(jnp.float32)                      # (1, 64)
    fc2w = params["fc2_w"].astype(jnp.float32)                               # (1, 64)
    fc2b = params["fc2_b"][None, :].astype(jnp.float32)                      # (1, 1)

    def const_spec(shape):
        nd = len(shape)
        return pl.BlockSpec(shape, lambda i, _nd=nd: (0,) * _nd)             # VMEM-resident

    return pl.pallas_call(
        speaker_kernel,
        out_shape=jax.ShapeDtypeStruct((B, 1), jnp.float32),
        grid=grid,
        in_specs=[
            pl.BlockSpec((BT, L_IN), lambda i: (i, 0)),                      # x: batch-tiled
            const_spec(w1.shape), const_spec(b1.shape),
            const_spec(w2_big.shape), const_spec(b2_2.shape),
            const_spec(fc1w.shape), const_spec(fc1b.shape),
            const_spec(fc2w.shape), const_spec(fc2b.shape),
        ],
        out_specs=pl.BlockSpec((BT, 1), lambda i: (i, 0)),
        scratch_shapes=[pltpu.VMEM((BT, P1U * C), jnp.bfloat16)],            # flat pooled conv1 acts
        compiler_params=pltpu.CompilerParams(dimension_semantics=("parallel",)),
    )(x, w1, b1, w2_big, b2_2, fc1w, fc1b, fc2w, fc2b)


def speaker_forward_ref(x, params):
    """Pure-JAX reference with exact PyTorch semantics (NCW, channel-major flatten)."""
    B, _ = x.shape
    w1 = params["conv1_w"][:, 0, :]                                     # (64, 3)
    h1 = sum(w1[None, :, k:k + 1] * x[:, None, k:k + T1] for k in range(3))
    h1 = jax.nn.relu(h1 + params["conv1_b"][None, :, None])             # (B, 64, 38)
    h1 = jnp.max(h1.reshape(B, 64, P1, 2), axis=-1)                     # (B, 64, 19)
    w2 = params["conv2_w"]                                              # (64, 64, 3)
    h2 = sum(jnp.einsum("oi,bit->bot", w2[:, :, k], h1[:, :, k:k + T2]) for k in range(3))
    h2 = jax.nn.relu(h2 + params["conv2_b"][None, :, None])             # (B, 64, 17)
    h2 = jnp.max(h2[:, :, :2 * P2].reshape(B, 64, P2, 2), axis=-1)      # (B, 64, 8)
    flat = h2.reshape(B, 64 * P2)                                       # channel-major
    z1 = jax.nn.relu(flat @ params["fc1_w"].T + params["fc1_b"])
    z2 = z1 @ params["fc2_w"].T + params["fc2_b"]
    return jax.nn.sigmoid(z2)


if __name__ == "__main__":
    key = jax.random.PRNGKey(0)
    pkey, xkey = jax.random.split(key)
    params = init_params(pkey)

    B = 2
    x = jax.random.normal(xkey, (B, L_IN), jnp.float32)

    out = jax.block_until_ready(speaker_forward_pallas(x, params))
    ref = jax.block_until_ready(speaker_forward_ref(x, params))

    assert out.shape == (B, 1), out.shape
    assert bool(jnp.all(jnp.isfinite(out)))
    assert bool(jnp.allclose(out, ref, rtol=2e-2, atol=5e-3)), (out, ref)
    print("KERNEL_OK")
</pallas_src>

<mosaic_0001>
module attributes {stable_mosaic.version = 11 : i64} {
  func.func @speaker_kernel(%arg0: i32, %arg1: memref<2x40xf32, #tpu.memory_space<vmem>>, %arg2: memref<3x1x64xf32, #tpu.memory_space<vmem>>, %arg3: memref<1x64xf32, #tpu.memory_space<vmem>>, %arg4: memref<256x128xbf16, #tpu.memory_space<vmem>>, %arg5: memref<1x128xf32, #tpu.memory_space<vmem>>, %arg6: memref<8x64x64xbf16, #tpu.memory_space<vmem>>, %arg7: memref<1x64xf32, #tpu.memory_space<vmem>>, %arg8: memref<1x64xf32, #tpu.memory_space<vmem>>, %arg9: memref<1x1xf32, #tpu.memory_space<vmem>>, %arg10: memref<2x1xf32, #tpu.memory_space<vmem>>, %arg11: memref<2x1152xbf16, #tpu.memory_space<vmem>>) attributes {dimension_semantics = [#tpu.dimension_semantics<parallel>], iteration_bounds = array<i64: 1>, scalar_prefetch = 0 : i64, scratch_operands = 1 : i64, tpu.core_type = #tpu.core_type<tc>, window_params = [{transform_indices = @transform_0, window_bounds = array<i64: 2, 40>}, {pipeline_mode = #tpu.pipeline_mode<synchronous>, transform_indices = @transform_1, window_bounds = array<i64: 3, 1, 64>}, {pipeline_mode = #tpu.pipeline_mode<synchronous>, transform_indices = @transform_2, window_bounds = array<i64: 1, 64>}, {pipeline_mode = #tpu.pipeline_mode<synchronous>, transform_indices = @transform_3, window_bounds = array<i64: 256, 128>}, {pipeline_mode = #tpu.pipeline_mode<synchronous>, transform_indices = @transform_4, window_bounds = array<i64: 1, 128>}, {pipeline_mode = #tpu.pipeline_mode<synchronous>, transform_indices = @transform_5, window_bounds = array<i64: 8, 64, 64>}, {pipeline_mode = #tpu.pipeline_mode<synchronous>, transform_indices = @transform_6, window_bounds = array<i64: 1, 64>}, {pipeline_mode = #tpu.pipeline_mode<synchronous>, transform_indices = @transform_7, window_bounds = array<i64: 1, 64>}, {pipeline_mode = #tpu.pipeline_mode<synchronous>, transform_indices = @transform_8, window_bounds = array<i64: 1, 1>}, {transform_indices = @transform_9, window_bounds = array<i64: 2, 1>}]} {
    %c0 = arith.constant 0 : index
    %c0_0 = arith.constant 0 : index
    %0 = vector.load %arg1[%c0, %c0_0] : memref<2x40xf32, #tpu.memory_space<vmem>>, vector<2x40xf32>
    %c0_1 = arith.constant 0 : index
    %c0_2 = arith.constant 0 : index
    %1 = vector.load %arg3[%c0_1, %c0_2] : memref<1x64xf32, #tpu.memory_space<vmem>>, vector<1x64xf32>
    %c0_3 = arith.constant 0 : index
    %c0_4 = arith.constant 0 : index
    %c0_5 = arith.constant 0 : index
    %2 = vector.load %arg2[%c0_3, %c0_4, %c0_5] : memref<3x1x64xf32, #tpu.memory_space<vmem>>, vector<1x1x64xf32>
    %3 = vector.shape_cast %2 : vector<1x1x64xf32> to vector<1x64xf32>
    %c1 = arith.constant 1 : index
    %c0_6 = arith.constant 0 : index
    %c0_7 = arith.constant 0 : index
    %4 = vector.load %arg2[%c1, %c0_6, %c0_7] : memref<3x1x64xf32, #tpu.memory_space<vmem>>, vector<1x1x64xf32>
    %5 = vector.shape_cast %4 : vector<1x1x64xf32> to vector<1x64xf32>
    %c2 = arith.constant 2 : index
    %c0_8 = arith.constant 0 : index
    %c0_9 = arith.constant 0 : index
    %6 = vector.load %arg2[%c2, %c0_8, %c0_9] : memref<3x1x64xf32, #tpu.memory_space<vmem>>, vector<1x1x64xf32>
    %7 = vector.shape_cast %6 : vector<1x1x64xf32> to vector<1x64xf32>
    %8 = vector.extract_strided_slice %0 {offsets = [0, 0], sizes = [2, 1], strides = [1, 1]} : vector<2x40xf32> to vector<2x1xf32>
    %9 = vector.shape_cast %8 : vector<2x1xf32> to vector<2x1xf32>
    %10 = vector.broadcast %9 : vector<2x1xf32> to vector<2x64xf32>
    %11 = vector.broadcast %3 : vector<1x64xf32> to vector<2x64xf32>
    %12 = arith.mulf %10, %11 : vector<2x64xf32>
    %13 = vector.extract_strided_slice %0 {offsets = [0, 1], sizes = [2, 1], strides = [1, 1]} : vector<2x40xf32> to vector<2x1xf32>
    %14 = vector.shape_cast %13 : vector<2x1xf32> to vector<2x1xf32>
    %15 = vector.broadcast %14 : vector<2x1xf32> to vector<2x64xf32>
    %16 = vector.broadcast %5 : vector<1x64xf32> to vector<2x64xf32>
    %17 = arith.mulf %15, %16 : vector<2x64xf32>
    %18 = arith.addf %12, %17 : vector<2x64xf32>
    %19 = vector.extract_strided_slice %0 {offsets = [0, 2], sizes = [2, 1], strides = [1, 1]} : vector<2x40xf32> to vector<2x1xf32>
    %20 = vector.shape_cast %19 : vector<2x1xf32> to vector<2x1xf32>
    %21 = vector.broadcast %20 : vector<2x1xf32> to vector<2x64xf32>
    %22 = vector.broadcast %7 : vector<1x64xf32> to vector<2x64xf32>
    %23 = arith.mulf %21, %22 : vector<2x64xf32>
    %24 = arith.addf %18, %23 : vector<2x64xf32>
    %25 = vector.broadcast %3 : vector<1x64xf32> to vector<2x64xf32>
    %26 = arith.mulf %15, %25 : vector<2x64xf32>
    %27 = vector.broadcast %5 : vector<1x64xf32> to vector<2x64xf32>
    %28 = arith.mulf %21, %27 : vector<2x64xf32>
    %29 = arith.addf %26, %28 : vector<2x64xf32>
    %30 = vector.extract_strided_slice %0 {offsets = [0, 3], sizes = [2, 1], strides = [1, 1]} : vector<2x40xf32> to vector<2x1xf32>
    %31 = vector.shape_cast %30 : vector<2x1xf32> to vector<2x1xf32>
    %32 = vector.broadcast %31 : vector<2x1xf32> to vector<2x64xf32>
    %33 = vector.broadcast %7 : vector<1x64xf32> to vector<2x64xf32>
    %34 = arith.mulf %32, %33 : vector<2x64xf32>
    %35 = arith.addf %29, %34 : vector<2x64xf32>
    %36 = arith.maximumf %24, %35 : vector<2x64xf32>
    %37 = vector.broadcast %1 : vector<1x64xf32> to vector<2x64xf32>
    %38 = arith.addf %36, %37 : vector<2x64xf32>
    %cst = arith.constant 0.000000e+00 : f32
    %39 = vector.broadcast %cst : f32 to vector<2x64xf32>
    %40 = arith.maximumf %38, %39 : vector<2x64xf32>
    %41 = vector.broadcast %3 : vector<1x64xf32> to vector<2x64xf32>
    %42 = arith.mulf %21, %41 : vector<2x64xf32>
    %43 = vector.broadcast %5 : vector<1x64xf32> to vector<2x64xf32>
    %44 = arith.mulf %32, %43 : vector<2x64xf32>
    %45 = arith.addf %42, %44 : vector<2x64xf32>
    %46 = vector.extract_strided_slice %0 {offsets = [0, 4], sizes = [2, 1], strides = [1, 1]} : vector<2x40xf32> to vector<2x1xf32>
    %47 = vector.shape_cast %46 : vector<2x1xf32> to vector<2x1xf32>
    %48 = vector.broadcast %47 : vector<2x1xf32> to vector<2x64xf32>
    %49 = vector.broadcast %7 : vector<1x64xf32> to vector<2x64xf32>
    %50 = arith.mulf %48, %49 : vector<2x64xf32>
    %51 = arith.addf %45, %50 : vector<2x64xf32>
    %52 = vector.broadcast %3 : vector<1x64xf32> to vector<2x64xf32>
    %53 = arith.mulf %32, %52 : vector<2x64xf32>
    %54 = vector.broadcast %5 : vector<1x64xf32> to vector<2x64xf32>
    %55 = arith.mulf %48, %54 : vector<2x64xf32>
    %56 = arith.addf %53, %55 : vector<2x64xf32>
    %57 = vector.extract_strided_slice %0 {offsets = [0, 5], sizes = [2, 1], strides = [1, 1]} : vector<2x40xf32> to vector<2x1xf32>
    %58 = vector.shape_cast %57 : vector<2x1xf32> to vector<2x1xf32>
    %59 = vector.broadcast %58 : vector<2x1xf32> to vector<2x64xf32>
    %60 = vector.broadcast %7 : vector<1x64xf32> to vector<2x64xf32>
    %61 = arith.mulf %59, %60 : vector<2x64xf32>
    %62 = arith.addf %56, %61 : vector<2x64xf32>
    %63 = arith.maximumf %51, %62 : vector<2x64xf32>
    %64 = vector.broadcast %1 : vector<1x64xf32> to vector<2x64xf32>
    %65 = arith.addf %63, %64 : vector<2x64xf32>
    %cst_10 = arith.constant 0.000000e+00 : f32
    %66 = vector.broadcast %cst_10 : f32 to vector<2x64xf32>
    %67 = arith.maximumf %65, %66 : vector<2x64xf32>
    %68 = tpu.concatenate %40, %67 in 1 : vector<2x64xf32>, vector<2x64xf32> -> vector<2x128xf32>
    %69 = arith.truncf %68 : vector<2x128xf32> to vector<2x128xbf16>
    %c0_11 = arith.constant 0 : index
    %c0_12 = arith.constant 0 : index
    %70 = vector.load %arg11[%c0_11, %c0_12] : memref<2x1152xbf16, #tpu.memory_space<vmem>>, vector<2x128xbf16>
    tpu.vector_store %arg11[%c0_11, %c0_12], %69 {strides = array<i32>} : memref<2x1152xbf16, #tpu.memory_space<vmem>>, vector<2x128xbf16>,
    %71 = vector.broadcast %3 : vector<1x64xf32> to vector<2x64xf32>
    %72 = arith.mulf %48, %71 : vector<2x64xf32>
    %73 = vector.broadcast %5 : vector<1x64xf32> to vector<2x64xf32>
    %74 = arith.mulf %59, %73 : vector<2x64xf32>
    %75 = arith.addf %72, %74 : vector<2x64xf32>
    %76 = vector.extract_strided_slice %0 {offsets = [0, 6], sizes = [2, 1], strides = [1, 1]} : vector<2x40xf32> to vector<2x1xf32>
    %77 = vector.shape_cast %76 : vector<2x1xf32> to vector<2x1xf32>
    %78 = vector.broadcast %77 : vector<2x1xf32> to vector<2x64xf32>
    %79 = vector.broadcast %7 : vector<1x64xf32> to vector<2x64xf32>
    %80 = arith.mulf %78, %79 : vector<2x64xf32>
    %81 = arith.addf %75, %80 : vector<2x64xf32>
    %82 = vector.broadcast %3 : vector<1x64xf32> to vector<2x64xf32>
    %83 = arith.mulf %59, %82 : vector<2x64xf32>
    %84 = vector.broadcast %5 : vector<1x64xf32> to vector<2x64xf32>
    %85 = arith.mulf %78, %84 : vector<2x64xf32>
    %86 = arith.addf %83, %85 : vector<2x64xf32>
    %87 = vector.extract_strided_slice %0 {offsets = [0, 7], sizes = [2, 1], strides = [1, 1]} : vector<2x40xf32> to vector<2x1xf32>
    %88 = vector.shape_cast %87 : vector<2x1xf32> to vector<2x1xf32>
    %89 = vector.broadcast %88 : vector<2x1xf32> to vector<2x64xf32>
    %90 = vector.broadcast %7 : vector<1x64xf32> to vector<2x64xf32>
    %91 = arith.mulf %89, %90 : vector<2x64xf32>
    %92 = arith.addf %86, %91 : vector<2x64xf32>
    %93 = arith.maximumf %81, %92 : vector<2x64xf32>
    %94 = vector.broadcast %1 : vector<1x64xf32> to vector<2x64xf32>
    %95 = arith.addf %93, %94 : vector<2x64xf32>
    %cst_13 = arith.constant 0.000000e+00 : f32
    %96 = vector.broadcast %cst_13 : f32 to vector<2x64xf32>
    %97 = arith.maximumf %95, %96 : vector<2x64xf32>
    %98 = vector.broadcast %3 : vector<1x64xf32> to vector<2x64xf32>
    %99 = arith.mulf %78, %98 : vector<2x64xf32>
    %100 = vector.broadcast %5 : vector<1x64xf32> to vector<2x64xf32>
    %101 = arith.mulf %89, %100 : vector<2x64xf32>
    %102 = arith.addf %99, %101 : vector<2x64xf32>
    %103 = vector.extract_strided_slice %0 {offsets = [0, 8], sizes = [2, 1], strides = [1, 1]} : vector<2x40xf32> to vector<2x1xf32>
    %104 = vector.shape_cast %103 : vector<2x1xf32> to vector<2x1xf32>
    %105 = vector.broadcast %104 : vector<2x1xf32> to vector<2x64xf32>
    %106 = vector.broadcast %7 : vector<1x64xf32> to vector<2x64xf32>
    %107 = arith.mulf %105, %106 : vector<2x64xf32>
    %108 = arith.addf %102, %107 : vector<2x64xf32>
    %109 = vector.broadcast %3 : vector<1x64xf32> to vector<2x64xf32>
    %110 = arith.mulf %89, %109 : vector<2x64xf32>
    %111 = vector.broadcast %5 : vector<1x64xf32> to vector<2x64xf32>
    %112 = arith.mulf %105, %111 : vector<2x64xf32>
    %113 = arith.addf %110, %112 : vector<2x64xf32>
    %114 = vector.extract_strided_slice %0 {offsets = [0, 9], sizes = [2, 1], strides = [1, 1]} : vector<2x40xf32> to vector<2x1xf32>
    %115 = vector.shape_cast %114 : vector<2x1xf32> to vector<2x1xf32>
    %116 = vector.broadcast %115 : vector<2x1xf32> to vector<2x64xf32>
    %117 = vector.broadcast %7 : vector<1x64xf32> to vector<2x64xf32>
    %118 = arith.mulf %116, %117 : vector<2x64xf32>
    %119 = arith.addf %113, %118 : vector<2x64xf32>
    %120 = arith.maximumf %108, %119 : vector<2x64xf32>
    %121 = vector.broadcast %1 : vector<1x64xf32> to vector<2x64xf32>
    %122 = arith.addf %120, %121 : vector<2x64xf32>
    %cst_14 = arith.constant 0.000000e+00 : f32
    %123 = vector.broadcast %cst_14 : f32 to vector<2x64xf32>
    %124 = arith.maximumf %122, %123 : vector<2x64xf32>
    %125 = tpu.concatenate %97, %124 in 1 : vector<2x64xf32>, vector<2x64xf32> -> vector<2x128xf32>
    %126 = arith.truncf %125 : vector<2x128xf32> to vector<2x128xbf16>
    %c0_15 = arith.constant 0 : index
    %c128 = arith.constant 128 : index
    %127 = vector.load %arg11[%c0_15, %c128] : memref<2x1152xbf16, #tpu.memory_space<vmem>>, vector<2x128xbf16>
    tpu.vector_store %arg11[%c0_15, %c128], %126 {strides = array<i32>} : memref<2x1152xbf16, #tpu.memory_space<vmem>>, vector<2x128xbf16>,
    %128 = vector.broadcast %3 : vector<1x64xf32> to vector<2x64xf32>
    %129 = arith.mulf %105, %128 : vector<2x64xf32>
    %130 = vector.broadcast %5 : vector<1x64xf32> to vector<2x64xf32>
    %131 = arith.mulf %116, %130 : vector<2x64xf32>
    %132 = arith.addf %129, %131 : vector<2x64xf32>
    %133 = vector.extract_strided_slice %0 {offsets = [0, 10], sizes = [2, 1], strides = [1, 1]} : vector<2x40xf32> to vector<2x1xf32>
    %134 = vector.shape_cast %133 : vector<2x1xf32> to vector<2x1xf32>
    %135 = vector.broadcast %134 : vector<2x1xf32> to vector<2x64xf32>
    %136 = vector.broadcast %7 : vector<1x64xf32> to vector<2x64xf32>
    %137 = arith.mulf %135, %136 : vector<2x64xf32>
    %138 = arith.addf %132, %137 : vector<2x64xf32>
    %139 = vector.broadcast %3 : vector<1x64xf32> to vector<2x64xf32>
    %140 = arith.mulf %116, %139 : vector<2x64xf32>
    %141 = vector.broadcast %5 : vector<1x64xf32> to vector<2x64xf32>
    %142 = arith.mulf %135, %141 : vector<2x64xf32>
    %143 = arith.addf %140, %142 : vector<2x64xf32>
    %144 = vector.extract_strided_slice %0 {offsets = [0, 11], sizes = [2, 1], strides = [1, 1]} : vector<2x40xf32> to vector<2x1xf32>
    %145 = vector.shape_cast %144 : vector<2x1xf32> to vector<2x1xf32>
    %146 = vector.broadcast %145 : vector<2x1xf32> to vector<2x64xf32>
    %147 = vector.broadcast %7 : vector<1x64xf32> to vector<2x64xf32>
    %148 = arith.mulf %146, %147 : vector<2x64xf32>
    %149 = arith.addf %143, %148 : vector<2x64xf32>
    %150 = arith.maximumf %138, %149 : vector<2x64xf32>
    %151 = vector.broadcast %1 : vector<1x64xf32> to vector<2x64xf32>
    %152 = arith.addf %150, %151 : vector<2x64xf32>
    %cst_16 = arith.constant 0.000000e+00 : f32
    %153 = vector.broadcast %cst_16 : f32 to vector<2x64xf32>
    %154 = arith.maximumf %152, %153 : vector<2x64xf32>
    %155 = vector.broadcast %3 : vector<1x64xf32> to vector<2x64xf32>
    %156 = arith.mulf %135, %155 : vector<2x64xf32>
    %157 = vector.broadcast %5 : vector<1x64xf32> to vector<2x64xf32>
    %158 = arith.mulf %146, %157 : vector<2x64xf32>
    %159 = arith.addf %156, %158 : vector<2x64xf32>
    %160 = vector.extract_strided_slice %0 {offsets = [0, 12], sizes = [2, 1], strides = [1, 1]} : vector<2x40xf32> to vector<2x1xf32>
    %161 = vector.shape_cast %160 : vector<2x1xf32> to vector<2x1xf32>
    %162 = vector.broadcast %161 : vector<2x1xf32> to vector<2x64xf32>
    %163 = vector.broadcast %7 : vector<1x64xf32> to vector<2x64xf32>
    %164 = arith.mulf %162, %163 : vector<2x64xf32>
    %165 = arith.addf %159, %164 : vector<2x64xf32>
    %166 = vector.broadcast %3 : vector<1x64xf32> to vector<2x64xf32>
    %167 = arith.mulf %146, %166 : vector<2x64xf32>
    %168 = vector.broadcast %5 : vector<1x64xf32> to vector<2x64xf32>
    %169 = arith.mulf %162, %168 : vector<2x64xf32>
    %170 = arith.addf %167, %169 : vector<2x64xf32>
    %171 = vector.extract_strided_slice %0 {offsets = [0, 13], sizes = [2, 1], strides = [1, 1]} : vector<2x40xf32> to vector<2x1xf32>
    %172 = vector.shape_cast %171 : vector<2x1xf32> to vector<2x1xf32>
    %173 = vector.broadcast %172 : vector<2x1xf32> to vector<2x64xf32>
    %174 = vector.broadcast %7 : vector<1x64xf32> to vector<2x64xf32>
    %175 = arith.mulf %173, %174 : vector<2x64xf32>
    %176 = arith.addf %170, %175 : vector<2x64xf32>
    %177 = arith.maximumf %165, %176 : vector<2x64xf32>
    %178 = vector.broadcast %1 : vector<1x64xf32> to vector<2x64xf32>
    %179 = arith.addf %177, %178 : vector<2x64xf32>
    %cst_17 = arith.constant 0.000000e+00 : f32
    %180 = vector.broadcast %cst_17 : f32 to vector<2x64xf32>
    %181 = arith.maximumf %179, %180 : vector<2x64xf32>
    %182 = tpu.concatenate %154, %181 in 1 : vector<2x64xf32>, vector<2x64xf32> -> vector<2x128xf32>
    %183 = arith.truncf %182 : vector<2x128xf32> to vector<2x128xbf16>
    %c0_18 = arith.constant 0 : index
    %c256 = arith.constant 256 : index
    %184 = vector.load %arg11[%c0_18, %c256] : memref<2x1152xbf16, #tpu.memory_space<vmem>>, vector<2x128xbf16>
    tpu.vector_store %arg11[%c0_18, %c256], %183 {strides = array<i32>} : memref<2x1152xbf16, #tpu.memory_space<vmem>>, vector<2x128xbf16>,
    %185 = vector.broadcast %3 : vector<1x64xf32> to vector<2x64xf32>
    %186 = arith.mulf %162, %185 : vector<2x64xf32>
    %187 = vector.broadcast %5 : vector<1x64xf32> to vector<2x64xf32>
    %188 = arith.mulf %173, %187 : vector<2x64xf32>
    %189 = arith.addf %186, %188 : vector<2x64xf32>
    %190 = vector.extract_strided_slice %0 {offsets = [0, 14], sizes = [2, 1], strides = [1, 1]} : vector<2x40xf32> to vector<2x1xf32>
    %191 = vector.shape_cast %190 : vector<2x1xf32> to vector<2x1xf32>
    %192 = vector.broadcast %191 : vector<2x1xf32> to vector<2x64xf32>
    %193 = vector.broadcast %7 : vector<1x64xf32> to vector<2x64xf32>
    %194 = arith.mulf %192, %193 : vector<2x64xf32>
    %195 = arith.addf %189, %194 : vector<2x64xf32>
    %196 = vector.broadcast %3 : vector<1x64xf32> to vector<2x64xf32>
    %197 = arith.mulf %173, %196 : vector<2x64xf32>
    %198 = vector.broadcast %5 : vector<1x64xf32> to vector<2x64xf32>
    %199 = arith.mulf %192, %198 : vector<2x64xf32>
    %200 = arith.addf %197, %199 : vector<2x64xf32>
    %201 = vector.extract_strided_slice %0 {offsets = [0, 15], sizes = [2, 1], strides = [1, 1]} : vector<2x40xf32> to vector<2x1xf32>
    %202 = vector.shape_cast %201 : vector<2x1xf32> to vector<2x1xf32>
    %203 = vector.broadcast %202 : vector<2x1xf32> to vector<2x64xf32>
    %204 = vector.broadcast %7 : vector<1x64xf32> to vector<2x64xf32>
    %205 = arith.mulf %203, %204 : vector<2x64xf32>
    %206 = arith.addf %200, %205 : vector<2x64xf32>
    %207 = arith.maximumf %195, %206 : vector<2x64xf32>
    %208 = vector.broadcast %1 : vector<1x64xf32> to vector<2x64xf32>
    %209 = arith.addf %207, %208 : vector<2x64xf32>
    %cst_19 = arith.constant 0.000000e+00 : f32
    %210 = vector.broadcast %cst_19 : f32 to vector<2x64xf32>
    %211 = arith.maximumf %209, %210 : vector<2x64xf32>
    %212 = vector.broadcast %3 : vector<1x64xf32> to vector<2x64xf32>
    %213 = arith.mulf %192, %212 : vector<2x64xf32>
    %214 = vector.broadcast %5 : vector<1x64xf32> to vector<2x64xf32>
    %215 = arith.mulf %203, %214 : vector<2x64xf32>
    %216 = arith.addf %213, %215 : vector<2x64xf32>
    %217 = vector.extract_strided_slice %0 {offsets = [0, 16], sizes = [2, 1], strides = [1, 1]} : vector<2x40xf32> to vector<2x1xf32>
    %218 = vector.shape_cast %217 : vector<2x1xf32> to vector<2x1xf32>
    %219 = vector.broadcast %218 : vector<2x1xf32> to vector<2x64xf32>
    %220 = vector.broadcast %7 : vector<1x64xf32> to vector<2x64xf32>
    %221 = arith.mulf %219, %220 : vector<2x64xf32>
    %222 = arith.addf %216, %221 : vector<2x64xf32>
    %223 = vector.broadcast %3 : vector<1x64xf32> to vector<2x64xf32>
    %224 = arith.mulf %203, %223 : vector<2x64xf32>
    %225 = vector.broadcast %5 : vector<1x64xf32> to vector<2x64xf32>
    %226 = arith.mulf %219, %225 : vector<2x64xf32>
    %227 = arith.addf %224, %226 : vector<2x64xf32>
    %228 = vector.extract_strided_slice %0 {offsets = [0, 17], sizes = [2, 1], strides = [1, 1]} : vector<2x40xf32> to vector<2x1xf32>
    %229 = vector.shape_cast %228 : vector<2x1xf32> to vector<2x1xf32>
    %230 = vector.broadcast %229 : vector<2x1xf32> to vector<2x64xf32>
    %231 = vector.broadcast %7 : vector<1x64xf32> to vector<2x64xf32>
    %232 = arith.mulf %230, %231 : vector<2x64xf32>
    %233 = arith.addf %227, %232 : vector<2x64xf32>
    %234 = arith.maximumf %222, %233 : vector<2x64xf32>
    %235 = vector.broadcast %1 : vector<1x64xf32> to vector<2x64xf32>
    %236 = arith.addf %234, %235 : vector<2x64xf32>
    %cst_20 = arith.constant 0.000000e+00 : f32
    %237 = vector.broadcast %cst_20 : f32 to vector<2x64xf32>
    %238 = arith.maximumf %236, %237 : vector<2x64xf32>
    %239 = tpu.concatenate %211, %238 in 1 : vector<2x64xf32>, vector<2x64xf32> -> vector<2x128xf32>
    %240 = arith.truncf %239 : vector<2x128xf32> to vector<2x128xbf16>
    %c0_21 = arith.constant 0 : index
    %c384 = arith.constant 384 : index
    %241 = vector.load %arg11[%c0_21, %c384] : memref<2x1152xbf16, #tpu.memory_space<vmem>>, vector<2x128xbf16>
    tpu.vector_store %arg11[%c0_21, %c384], %240 {strides = array<i32>} : memref<2x1152xbf16, #tpu.memory_space<vmem>>, vector<2x128xbf16>,
    %242 = vector.broadcast %3 : vector<1x64xf32> to vector<2x64xf32>
    %243 = arith.mulf %219, %242 : vector<2x64xf32>
    %244 = vector.broadcast %5 : vector<1x64xf32> to vector<2x64xf32>
    %245 = arith.mulf %230, %244 : vector<2x64xf32>
    %246 = arith.addf %243, %245 : vector<2x64xf32>
    %247 = vector.extract_strided_slice %0 {offsets = [0, 18], sizes = [2, 1], strides = [1, 1]} : vector<2x40xf32> to vector<2x1xf32>
    %248 = vector.shape_cast %247 : vector<2x1xf32> to vector<2x1xf32>
    %249 = vector.broadcast %248 : vector<2x1xf32> to vector<2x64xf32>
    %250 = vector.broadcast %7 : vector<1x64xf32> to vector<2x64xf32>
    %251 = arith.mulf %249, %250 : vector<2x64xf32>
    %252 = arith.addf %246, %251 : vector<2x64xf32>
    %253 = vector.broadcast %3 : vector<1x64xf32> to vector<2x64xf32>
    %254 = arith.mulf %230, %253 : vector<2x64xf32>
    %255 = vector.broadcast %5 : vector<1x64xf32> to vector<2x64xf32>
    %256 = arith.mulf %249, %255 : vector<2x64xf32>
    %257 = arith.addf %254, %256 : vector<2x64xf32>
    %258 = vector.extract_strided_slice %0 {offsets = [0, 19], sizes = [2, 1], strides = [1, 1]} : vector<2x40xf32> to vector<2x1xf32>
    %259 = vector.shape_cast %258 : vector<2x1xf32> to vector<2x1xf32>
    %260 = vector.broadcast %259 : vector<2x1xf32> to vector<2x64xf32>
    %261 = vector.broadcast %7 : vector<1x64xf32> to vector<2x64xf32>
    %262 = arith.mulf %260, %261 : vector<2x64xf32>
    %263 = arith.addf %257, %262 : vector<2x64xf32>
    %264 = arith.maximumf %252, %263 : vector<2x64xf32>
    %265 = vector.broadcast %1 : vector<1x64xf32> to vector<2x64xf32>
    %266 = arith.addf %264, %265 : vector<2x64xf32>
    %cst_22 = arith.constant 0.000000e+00 : f32
    %267 = vector.broadcast %cst_22 : f32 to vector<2x64xf32>
    %268 = arith.maximumf %266, %267 : vector<2x64xf32>
    %269 = vector.broadcast %3 : vector<1x64xf32> to vector<2x64xf32>
    %270 = arith.mulf %249, %269 : vector<2x64xf32>
    %271 = vector.broadcast %5 : vector<1x64xf32> to vector<2x64xf32>
    %272 = arith.mulf %260, %271 : vector<2x64xf32>
    %273 = arith.addf %270, %272 : vector<2x64xf32>
    %274 = vector.extract_strided_slice %0 {offsets = [0, 20], sizes = [2, 1], strides = [1, 1]} : vector<2x40xf32> to vector<2x1xf32>
    %275 = vector.shape_cast %274 : vector<2x1xf32> to vector<2x1xf32>
    %276 = vector.broadcast %275 : vector<2x1xf32> to vector<2x64xf32>
    %277 = vector.broadcast %7 : vector<1x64xf32> to vector<2x64xf32>
    %278 = arith.mulf %276, %277 : vector<2x64xf32>
    %279 = arith.addf %273, %278 : vector<2x64xf32>
    %280 = vector.broadcast %3 : vector<1x64xf32> to vector<2x64xf32>
    %281 = arith.mulf %260, %280 : vector<2x64xf32>
    %282 = vector.broadcast %5 : vector<1x64xf32> to vector<2x64xf32>
    %283 = arith.mulf %276, %282 : vector<2x64xf32>
    %284 = arith.addf %281, %283 : vector<2x64xf32>
    %285 = vector.extract_strided_slice %0 {offsets = [0, 21], sizes = [2, 1], strides = [1, 1]} : vector<2x40xf32> to vector<2x1xf32>
    %286 = vector.shape_cast %285 : vector<2x1xf32> to vector<2x1xf32>
    %287 = vector.broadcast %286 : vector<2x1xf32> to vector<2x64xf32>
    %288 = vector.broadcast %7 : vector<1x64xf32> to vector<2x64xf32>
    %289 = arith.mulf %287, %288 : vector<2x64xf32>
    %290 = arith.addf %284, %289 : vector<2x64xf32>
    %291 = arith.maximumf %279, %290 : vector<2x64xf32>
    %292 = vector.broadcast %1 : vector<1x64xf32> to vector<2x64xf32>
    %293 = arith.addf %291, %292 : vector<2x64xf32>
    %cst_23 = arith.constant 0.000000e+00 : f32
    %294 = vector.broadcast %cst_23 : f32 to vector<2x64xf32>
    %295 = arith.maximumf %293, %294 : vector<2x64xf32>
    %296 = tpu.concatenate %268, %295 in 1 : vector<2x64xf32>, vector<2x64xf32> -> vector<2x128xf32>
    %297 = arith.truncf %296 : vector<2x128xf32> to vector<2x128xbf16>
    %c0_24 = arith.constant 0 : index
    %c512 = arith.constant 512 : index
    %298 = vector.load %arg11[%c0_24, %c512] : memref<2x1152xbf16, #tpu.memory_space<vmem>>, vector<2x128xbf16>
    tpu.vector_store %arg11[%c0_24, %c512], %297 {strides = array<i32>} : memref<2x1152xbf16, #tpu.memory_space<vmem>>, vector<2x128xbf16>,
    %299 = vector.broadcast %3 : vector<1x64xf32> to vector<2x64xf32>
    %300 = arith.mulf %276, %299 : vector<2x64xf32>
    %301 = vector.broadcast %5 : vector<1x64xf32> to vector<2x64xf32>
    %302 = arith.mulf %287, %301 : vector<2x64xf32>
    %303 = arith.addf %300, %302 : vector<2x64xf32>
    %304 = vector.extract_strided_slice %0 {offsets = [0, 22], sizes = [2, 1], strides = [1, 1]} : vector<2x40xf32> to vector<2x1xf32>
    %305 = vector.shape_cast %304 : vector<2x1xf32> to vector<2x1xf32>
    %306 = vector.broadcast %305 : vector<2x1xf32> to vector<2x64xf32>
    %307 = vector.broadcast %7 : vector<1x64xf32> to vector<2x64xf32>
    %308 = arith.mulf %306, %307 : vector<2x64xf32>
    %309 = arith.addf %303, %308 : vector<2x64xf32>
    %310 = vector.broadcast %3 : vector<1x64xf32> to vector<2x64xf32>
    %311 = arith.mulf %287, %310 : vector<2x64xf32>
    %312 = vector.broadcast %5 : vector<1x64xf32> to vector<2x64xf32>
    %313 = arith.mulf %306, %312 : vector<2x64xf32>
    %314 = arith.addf %311, %313 : vector<2x64xf32>
    %315 = vector.extract_strided_slice %0 {offsets = [0, 23], sizes = [2, 1], strides = [1, 1]} : vector<2x40xf32> to vector<2x1xf32>
    %316 = vector.shape_cast %315 : vector<2x1xf32> to vector<2x1xf32>
    %317 = vector.broadcast %316 : vector<2x1xf32> to vector<2x64xf32>
    %318 = vector.broadcast %7 : vector<1x64xf32> to vector<2x64xf32>
    %319 = arith.mulf %317, %318 : vector<2x64xf32>
    %320 = arith.addf %314, %319 : vector<2x64xf32>
    %321 = arith.maximumf %309, %320 : vector<2x64xf32>
    %322 = vector.broadcast %1 : vector<1x64xf32> to vector<2x64xf32>
    %323 = arith.addf %321, %322 : vector<2x64xf32>
    %cst_25 = arith.constant 0.000000e+00 : f32
    %324 = vector.broadcast %cst_25 : f32 to vector<2x64xf32>
    %325 = arith.maximumf %323, %324 : vector<2x64xf32>
    %326 = vector.broadcast %3 : vector<1x64xf32> to vector<2x64xf32>
    %327 = arith.mulf %306, %326 : vector<2x64xf32>
    %328 = vector.broadcast %5 : vector<1x64xf32> to vector<2x64xf32>
    %329 = arith.mulf %317, %328 : vector<2x64xf32>
    %330 = arith.addf %327, %329 : vector<2x64xf32>
    %331 = vector.extract_strided_slice %0 {offsets = [0, 24], sizes = [2, 1], strides = [1, 1]} : vector<2x40xf32> to vector<2x1xf32>
    %332 = vector.shape_cast %331 : vector<2x1xf32> to vector<2x1xf32>
    %333 = vector.broadcast %332 : vector<2x1xf32> to vector<2x64xf32>
    %334 = vector.broadcast %7 : vector<1x64xf32> to vector<2x64xf32>
    %335 = arith.mulf %333, %334 : vector<2x64xf32>
    %336 = arith.addf %330, %335 : vector<2x64xf32>
    %337 = vector.broadcast %3 : vector<1x64xf32> to vector<2x64xf32>
    %338 = arith.mulf %317, %337 : vector<2x64xf32>
    %339 = vector.broadcast %5 : vector<1x64xf32> to vector<2x64xf32>
    %340 = arith.mulf %333, %339 : vector<2x64xf32>
    %341 = arith.addf %338, %340 : vector<2x64xf32>
    %342 = vector.extract_strided_slice %0 {offsets = [0, 25], sizes = [2, 1], strides = [1, 1]} : vector<2x40xf32> to vector<2x1xf32>
    %343 = vector.shape_cast %342 : vector<2x1xf32> to vector<2x1xf32>
    %344 = vector.broadcast %343 : vector<2x1xf32> to vector<2x64xf32>
    %345 = vector.broadcast %7 : vector<1x64xf32> to vector<2x64xf32>
    %346 = arith.mulf %344, %345 : vector<2x64xf32>
    %347 = arith.addf %341, %346 : vector<2x64xf32>
    %348 = arith.maximumf %336, %347 : vector<2x64xf32>
    %349 = vector.broadcast %1 : vector<1x64xf32> to vector<2x64xf32>
    %350 = arith.addf %348, %349 : vector<2x64xf32>
    %cst_26 = arith.constant 0.000000e+00 : f32
    %351 = vector.broadcast %cst_26 : f32 to vector<2x64xf32>
    %352 = arith.maximumf %350, %351 : vector<2x64xf32>
    %353 = tpu.concatenate %325, %352 in 1 : vector<2x64xf32>, vector<2x64xf32> -> vector<2x128xf32>
    %354 = arith.truncf %353 : vector<2x128xf32> to vector<2x128xbf16>
    %c0_27 = arith.constant 0 : index
    %c640 = arith.constant 640 : index
    %355 = vector.load %arg11[%c0_27, %c640] : memref<2x1152xbf16, #tpu.memory_space<vmem>>, vector<2x128xbf16>
    tpu.vector_store %arg11[%c0_27, %c640], %354 {strides = array<i32>} : memref<2x1152xbf16, #tpu.memory_space<vmem>>, vector<2x128xbf16>,
    %356 = vector.broadcast %3 : vector<1x64xf32> to vector<2x64xf32>
    %357 = arith.mulf %333, %356 : vector<2x64xf32>
    %358 = vector.broadcast %5 : vector<1x64xf32> to vector<2x64xf32>
    %359 = arith.mulf %344, %358 : vector<2x64xf32>
    %360 = arith.addf %357, %359 : vector<2x64xf32>
    %361 = vector.extract_strided_slice %0 {offsets = [0, 26], sizes = [2, 1], strides = [1, 1]} : vector<2x40xf32> to vector<2x1xf32>
    %362 = vector.shape_cast %361 : vector<2x1xf32> to vector<2x1xf32>
    %363 = vector.broadcast %362 : vector<2x1xf32> to vector<2x64xf32>
    %364 = vector.broadcast %7 : vector<1x64xf32> to vector<2x64xf32>
    %365 = arith.mulf %363, %364 : vector<2x64xf32>
    %366 = arith.addf %360, %365 : vector<2x64xf32>
    %367 = vector.broadcast %3 : vector<1x64xf32> to vector<2x64xf32>
    %368 = arith.mulf %344, %367 : vector<2x64xf32>
    %369 = vector.broadcast %5 : vector<1x64xf32> to vector<2x64xf32>
    %370 = arith.mulf %363, %369 : vector<2x64xf32>
    %371 = arith.addf %368, %370 : vector<2x64xf32>
    %372 = vector.extract_strided_slice %0 {offsets = [0, 27], sizes = [2, 1], strides = [1, 1]} : vector<2x40xf32> to vector<2x1xf32>
    %373 = vector.shape_cast %372 : vector<2x1xf32> to vector<2x1xf32>
    %374 = vector.broadcast %373 : vector<2x1xf32> to vector<2x64xf32>
    %375 = vector.broadcast %7 : vector<1x64xf32> to vector<2x64xf32>
    %376 = arith.mulf %374, %375 : vector<2x64xf32>
    %377 = arith.addf %371, %376 : vector<2x64xf32>
    %378 = arith.maximumf %366, %377 : vector<2x64xf32>
    %379 = vector.broadcast %1 : vector<1x64xf32> to vector<2x64xf32>
    %380 = arith.addf %378, %379 : vector<2x64xf32>
    %cst_28 = arith.constant 0.000000e+00 : f32
    %381 = vector.broadcast %cst_28 : f32 to vector<2x64xf32>
    %382 = arith.maximumf %380, %381 : vector<2x64xf32>
    %383 = vector.broadcast %3 : vector<1x64xf32> to vector<2x64xf32>
    %384 = arith.mulf %363, %383 : vector<2x64xf32>
    %385 = vector.broadcast %5 : vector<1x64xf32> to vector<2x64xf32>
    %386 = arith.mulf %374, %385 : vector<2x64xf32>
    %387 = arith.addf %384, %386 : vector<2x64xf32>
    %388 = vector.extract_strided_slice %0 {offsets = [0, 28], sizes = [2, 1], strides = [1, 1]} : vector<2x40xf32> to vector<2x1xf32>
    %389 = vector.shape_cast %388 : vector<2x1xf32> to vector<2x1xf32>
    %390 = vector.broadcast %389 : vector<2x1xf32> to vector<2x64xf32>
    %391 = vector.broadcast %7 : vector<1x64xf32> to vector<2x64xf32>
    %392 = arith.mulf %390, %391 : vector<2x64xf32>
    %393 = arith.addf %387, %392 : vector<2x64xf32>
    %394 = vector.broadcast %3 : vector<1x64xf32> to vector<2x64xf32>
    %395 = arith.mulf %374, %394 : vector<2x64xf32>
    %396 = vector.broadcast %5 : vector<1x64xf32> to vector<2x64xf32>
    %397 = arith.mulf %390, %396 : vector<2x64xf32>
    %398 = arith.addf %395, %397 : vector<2x64xf32>
    %399 = vector.extract_strided_slice %0 {offsets = [0, 29], sizes = [2, 1], strides = [1, 1]} : vector<2x40xf32> to vector<2x1xf32>
    %400 = vector.shape_cast %399 : vector<2x1xf32> to vector<2x1xf32>
    %401 = vector.broadcast %400 : vector<2x1xf32> to vector<2x64xf32>
    %402 = vector.broadcast %7 : vector<1x64xf32> to vector<2x64xf32>
    %403 = arith.mulf %401, %402 : vector<2x64xf32>
    %404 = arith.addf %398, %403 : vector<2x64xf32>
    %405 = arith.maximumf %393, %404 : vector<2x64xf32>
    %406 = vector.broadcast %1 : vector<1x64xf32> to vector<2x64xf32>
    %407 = arith.addf %405, %406 : vector<2x64xf32>
    %cst_29 = arith.constant 0.000000e+00 : f32
    %408 = vector.broadcast %cst_29 : f32 to vector<2x64xf32>
    %409 = arith.maximumf %407, %408 : vector<2x64xf32>
    %410 = tpu.concatenate %382, %409 in 1 : vector<2x64xf32>, vector<2x64xf32> -> vector<2x128xf32>
    %411 = arith.truncf %410 : vector<2x128xf32> to vector<2x128xbf16>
    %c0_30 = arith.constant 0 : index
    %c768 = arith.constant 768 : index
    %412 = vector.load %arg11[%c0_30, %c768] : memref<2x1152xbf16, #tpu.memory_space<vmem>>, vector<2x128xbf16>
    tpu.vector_store %arg11[%c0_30, %c768], %411 {strides = array<i32>} : memref<2x1152xbf16, #tpu.memory_space<vmem>>, vector<2x128xbf16>,
    %413 = vector.broadcast %3 : vector<1x64xf32> to vector<2x64xf32>
    %414 = arith.mulf %390, %413 : vector<2x64xf32>
    %415 = vector.broadcast %5 : vector<1x64xf32> to vector<2x64xf32>
    %416 = arith.mulf %401, %415 : vector<2x64xf32>
    %417 = arith.addf %414, %416 : vector<2x64xf32>
    %418 = vector.extract_strided_slice %0 {offsets = [0, 30], sizes = [2, 1], strides = [1, 1]} : vector<2x40xf32> to vector<2x1xf32>
    %419 = vector.shape_cast %418 : vector<2x1xf32> to vector<2x1xf32>
    %420 = vector.broadcast %419 : vector<2x1xf32> to vector<2x64xf32>
    %421 = vector.broadcast %7 : vector<1x64xf32> to vector<2x64xf32>
    %422 = arith.mulf %420, %421 : vector<2x64xf32>
    %423 = arith.addf %417, %422 : vector<2x64xf32>
    %424 = vector.broadcast %3 : vector<1x64xf32> to vector<2x64xf32>
    %425 = arith.mulf %401, %424 : vector<2x64xf32>
    %426 = vector.broadcast %5 : vector<1x64xf32> to vector<2x64xf32>
    %427 = arith.mulf %420, %426 : vector<2x64xf32>
    %428 = arith.addf %425, %427 : vector<2x64xf32>
    %429 = vector.extract_strided_slice %0 {offsets = [0, 31], sizes = [2, 1], strides = [1, 1]} : vector<2x40xf32> to vector<2x1xf32>
    %430 = vector.shape_cast %429 : vector<2x1xf32> to vector<2x1xf32>
    %431 = vector.broadcast %430 : vector<2x1xf32> to vector<2x64xf32>
    %432 = vector.broadcast %7 : vector<1x64xf32> to vector<2x64xf32>
    %433 = arith.mulf %431, %432 : vector<2x64xf32>
    %434 = arith.addf %428, %433 : vector<2x64xf32>
    %435 = arith.maximumf %423, %434 : vector<2x64xf32>
    %436 = vector.broadcast %1 : vector<1x64xf32> to vector<2x64xf32>
    %437 = arith.addf %435, %436 : vector<2x64xf32>
    %cst_31 = arith.constant 0.000000e+00 : f32
    %438 = vector.broadcast %cst_31 : f32 to vector<2x64xf32>
    %439 = arith.maximumf %437, %438 : vector<2x64xf32>
    %440 = vector.broadcast %3 : vector<1x64xf32> to vector<2x64xf32>
    %441 = arith.mulf %420, %440 : vector<2x64xf32>
    %442 = vector.broadcast %5 : vector<1x64xf32> to vector<2x64xf32>
    %443 = arith.mulf %431, %442 : vector<2x64xf32>
    %444 = arith.addf %441, %443 : vector<2x64xf32>
    %445 = vector.extract_strided_slice %0 {offsets = [0, 32], sizes = [2, 1], strides = [1, 1]} : vector<2x40xf32> to vector<2x1xf32>
    %446 = vector.shape_cast %445 : vector<2x1xf32> to vector<2x1xf32>
    %447 = vector.broadcast %446 : vector<2x1xf32> to vector<2x64xf32>
    %448 = vector.broadcast %7 : vector<1x64xf32> to vector<2x64xf32>
    %449 = arith.mulf %447, %448 : vector<2x64xf32>
    %450 = arith.addf %444, %449 : vector<2x64xf32>
    %451 = vector.broadcast %3 : vector<1x64xf32> to vector<2x64xf32>
    %452 = arith.mulf %431, %451 : vector<2x64xf32>
    %453 = vector.broadcast %5 : vector<1x64xf32> to vector<2x64xf32>
    %454 = arith.mulf %447, %453 : vector<2x64xf32>
    %455 = arith.addf %452, %454 : vector<2x64xf32>
    %456 = vector.extract_strided_slice %0 {offsets = [0, 33], sizes = [2, 1], strides = [1, 1]} : vector<2x40xf32> to vector<2x1xf32>
    %457 = vector.shape_cast %456 : vector<2x1xf32> to vector<2x1xf32>
    %458 = vector.broadcast %457 : vector<2x1xf32> to vector<2x64xf32>
    %459 = vector.broadcast %7 : vector<1x64xf32> to vector<2x64xf32>
    %460 = arith.mulf %458, %459 : vector<2x64xf32>
    %461 = arith.addf %455, %460 : vector<2x64xf32>
    %462 = arith.maximumf %450, %461 : vector<2x64xf32>
    %463 = vector.broadcast %1 : vector<1x64xf32> to vector<2x64xf32>
    %464 = arith.addf %462, %463 : vector<2x64xf32>
    %cst_32 = arith.constant 0.000000e+00 : f32
    %465 = vector.broadcast %cst_32 : f32 to vector<2x64xf32>
    %466 = arith.maximumf %464, %465 : vector<2x64xf32>
    %467 = tpu.concatenate %439, %466 in 1 : vector<2x64xf32>, vector<2x64xf32> -> vector<2x128xf32>
    %468 = arith.truncf %467 : vector<2x128xf32> to vector<2x128xbf16>
    %c0_33 = arith.constant 0 : index
    %c896 = arith.constant 896 : index
    %469 = vector.load %arg11[%c0_33, %c896] : memref<2x1152xbf16, #tpu.memory_space<vmem>>, vector<2x128xbf16>
    tpu.vector_store %arg11[%c0_33, %c896], %468 {strides = array<i32>} : memref<2x1152xbf16, #tpu.memory_space<vmem>>, vector<2x128xbf16>,
    %470 = vector.broadcast %3 : vector<1x64xf32> to vector<2x64xf32>
    %471 = arith.mulf %447, %470 : vector<2x64xf32>
    %472 = vector.broadcast %5 : vector<1x64xf32> to vector<2x64xf32>
    %473 = arith.mulf %458, %472 : vector<2x64xf32>
    %474 = arith.addf %471, %473 : vector<2x64xf32>
    %475 = vector.extract_strided_slice %0 {offsets = [0, 34], sizes = [2, 1], strides = [1, 1]} : vector<2x40xf32> to vector<2x1xf32>
    %476 = vector.shape_cast %475 : vector<2x1xf32> to vector<2x1xf32>
    %477 = vector.broadcast %476 : vector<2x1xf32> to vector<2x64xf32>
    %478 = vector.broadcast %7 : vector<1x64xf32> to vector<2x64xf32>
    %479 = arith.mulf %477, %478 : vector<2x64xf32>
    %480 = arith.addf %474, %479 : vector<2x64xf32>
    %481 = vector.broadcast %3 : vector<1x64xf32> to vector<2x64xf32>
    %482 = arith.mulf %458, %481 : vector<2x64xf32>
    %483 = vector.broadcast %5 : vector<1x64xf32> to vector<2x64xf32>
    %484 = arith.mulf %477, %483 : vector<2x64xf32>
    %485 = arith.addf %482, %484 : vector<2x64xf32>
    %486 = vector.extract_strided_slice %0 {offsets = [0, 35], sizes = [2, 1], strides = [1, 1]} : vector<2x40xf32> to vector<2x1xf32>
    %487 = vector.shape_cast %486 : vector<2x1xf32> to vector<2x1xf32>
    %488 = vector.broadcast %487 : vector<2x1xf32> to vector<2x64xf32>
    %489 = vector.broadcast %7 : vector<1x64xf32> to vector<2x64xf32>
    %490 = arith.mulf %488, %489 : vector<2x64xf32>
    %491 = arith.addf %485, %490 : vector<2x64xf32>
    %492 = arith.maximumf %480, %491 : vector<2x64xf32>
    %493 = vector.broadcast %1 : vector<1x64xf32> to vector<2x64xf32>
    %494 = arith.addf %492, %493 : vector<2x64xf32>
    %cst_34 = arith.constant 0.000000e+00 : f32
    %495 = vector.broadcast %cst_34 : f32 to vector<2x64xf32>
    %496 = arith.maximumf %494, %495 : vector<2x64xf32>
    %497 = vector.broadcast %3 : vector<1x64xf32> to vector<2x64xf32>
    %498 = arith.mulf %477, %497 : vector<2x64xf32>
    %499 = vector.broadcast %5 : vector<1x64xf32> to vector<2x64xf32>
    %500 = arith.mulf %488, %499 : vector<2x64xf32>
    %501 = arith.addf %498, %500 : vector<2x64xf32>
    %502 = vector.extract_strided_slice %0 {offsets = [0, 36], sizes = [2, 1], strides = [1, 1]} : vector<2x40xf32> to vector<2x1xf32>
    %503 = vector.shape_cast %502 : vector<2x1xf32> to vector<2x1xf32>
    %504 = vector.broadcast %503 : vector<2x1xf32> to vector<2x64xf32>
    %505 = vector.broadcast %7 : vector<1x64xf32> to vector<2x64xf32>
    %506 = arith.mulf %504, %505 : vector<2x64xf32>
    %507 = arith.addf %501, %506 : vector<2x64xf32>
    %508 = vector.broadcast %3 : vector<1x64xf32> to vector<2x64xf32>
    %509 = arith.mulf %488, %508 : vector<2x64xf32>
    %510 = vector.broadcast %5 : vector<1x64xf32> to vector<2x64xf32>
    %511 = arith.mulf %504, %510 : vector<2x64xf32>
    %512 = arith.addf %509, %511 : vector<2x64xf32>
    %513 = vector.extract_strided_slice %0 {offsets = [0, 37], sizes = [2, 1], strides = [1, 1]} : vector<2x40xf32> to vector<2x1xf32>
    %514 = vector.shape_cast %513 : vector<2x1xf32> to vector<2x1xf32>
    %515 = vector.broadcast %514 : vector<2x1xf32> to vector<2x64xf32>
    %516 = vector.broadcast %7 : vector<1x64xf32> to vector<2x64xf32>
    %517 = arith.mulf %515, %516 : vector<2x64xf32>
    %518 = arith.addf %512, %517 : vector<2x64xf32>
    %519 = arith.maximumf %507, %518 : vector<2x64xf32>
    %520 = vector.broadcast %1 : vector<1x64xf32> to vector<2x64xf32>
    %521 = arith.addf %519, %520 : vector<2x64xf32>
    %cst_35 = arith.constant 0.000000e+00 : f32
    %522 = vector.broadcast %cst_35 : f32 to vector<2x64xf32>
    %523 = arith.maximumf %521, %522 : vector<2x64xf32>
    %524 = tpu.concatenate %496, %523 in 1 : vector<2x64xf32>, vector<2x64xf32> -> vector<2x128xf32>
    %525 = arith.truncf %524 : vector<2x128xf32> to vector<2x128xbf16>
    %c0_36 = arith.constant 0 : index
    %c1024 = arith.constant 1024 : index
    %526 = vector.load %arg11[%c0_36, %c1024] : memref<2x1152xbf16, #tpu.memory_space<vmem>>, vector<2x128xbf16>
    tpu.vector_store %arg11[%c0_36, %c1024], %525 {strides = array<i32>} : memref<2x1152xbf16, #tpu.memory_space<vmem>>, vector<2x128xbf16>,
    %c0_37 = arith.constant 0 : index
    %c0_38 = arith.constant 0 : index
    %527 = vector.load %arg4[%c0_37, %c0_38] : memref<256x128xbf16, #tpu.memory_space<vmem>>, vector<256x128xbf16>
    %c0_39 = arith.constant 0 : index
    %c0_40 = arith.constant 0 : index
    %528 = vector.load %arg5[%c0_39, %c0_40] : memref<1x128xf32, #tpu.memory_space<vmem>>, vector<1x128xf32>
    %cst_41 = arith.constant 0.000000e+00 : f32
    %529 = vector.broadcast %cst_41 : f32 to vector<2x64xf32>
    %c0_42 = arith.constant 0 : index
    %c0_43 = arith.constant 0 : index
    %530 = vector.load %arg11[%c0_42, %c0_43] : memref<2x1152xbf16, #tpu.memory_space<vmem>>, vector<2x256xbf16>
    %cst_44 = arith.constant dense<0.000000e+00> : vector<2x128xf32>
    %531 = tpu.matmul %530, %527, %cst_44 {dimension_numbers = #tpu.dot_dimension_numbers<[1], [0], [0], [1], [0, 0, 1, 1], [], []>} : vector<2x256xbf16>, vector<256x128xbf16>, vector<2x128xf32> -> vector<2x128xf32>
    %532 = vector.broadcast %528 : vector<1x128xf32> to vector<2x128xf32>
    %533 = arith.addf %531, %532 : vector<2x128xf32>
    %cst_45 = arith.constant 0.000000e+00 : f32
    %534 = vector.broadcast %cst_45 : f32 to vector<2x128xf32>
    %535 = arith.maximumf %533, %534 : vector<2x128xf32>
    %536 = vector.extract_strided_slice %535 {offsets = [0, 0], sizes = [2, 64], strides = [1, 1]} : vector<2x128xf32> to vector<2x64xf32>
    %537 = vector.extract_strided_slice %535 {offsets = [0, 64], sizes = [2, 64], strides = [1, 1]} : vector<2x128xf32> to vector<2x64xf32>
    %538 = arith.maximumf %536, %537 : vector<2x64xf32>
    %539 = arith.truncf %538 : vector<2x64xf32> to vector<2x64xbf16>
    %c0_46 = arith.constant 0 : index
    %c0_47 = arith.constant 0 : index
    %c0_48 = arith.constant 0 : index
    %540 = vector.load %arg6[%c0_46, %c0_47, %c0_48] : memref<8x64x64xbf16, #tpu.memory_space<vmem>>, vector<1x64x64xbf16>
    %541 = vector.shape_cast %540 : vector<1x64x64xbf16> to vector<64x64xbf16>
    %cst_49 = arith.constant dense<0.000000e+00> : vector<2x64xf32>
    %542 = tpu.matmul %539, %541, %cst_49 {dimension_numbers = #tpu.dot_dimension_numbers<[1], [0], [0], [1], [0, 0, 1, 1], [], []>} : vector<2x64xbf16>, vector<64x64xbf16>, vector<2x64xf32> -> vector<2x64xf32>
    %543 = arith.addf %529, %542 : vector<2x64xf32>
    %c0_50 = arith.constant 0 : index
    %c128_51 = arith.constant 128 : index
    %544 = vector.load %arg11[%c0_50, %c128_51] : memref<2x1152xbf16, #tpu.memory_space<vmem>>, vector<2x256xbf16>
    %cst_52 = arith.constant dense<0.000000e+00> : vector<2x128xf32>
    %545 = tpu.matmul %544, %527, %cst_52 {dimension_numbers = #tpu.dot_dimension_numbers<[1], [0], [0], [1], [0, 0, 1, 1], [], []>} : vector<2x256xbf16>, vector<256x128xbf16>, vector<2x128xf32> -> vector<2x128xf32>
    %546 = vector.broadcast %528 : vector<1x128xf32> to vector<2x128xf32>
    %547 = arith.addf %545, %546 : vector<2x128xf32>
    %cst_53 = arith.constant 0.000000e+00 : f32
    %548 = vector.broadcast %cst_53 : f32 to vector<2x128xf32>
    %549 = arith.maximumf %547, %548 : vector<2x128xf32>
    %550 = vector.extract_strided_slice %549 {offsets = [0, 0], sizes = [2, 64], strides = [1, 1]} : vector<2x128xf32> to vector<2x64xf32>
    %551 = vector.extract_strided_slice %549 {offsets = [0, 64], sizes = [2, 64], strides = [1, 1]} : vector<2x128xf32> to vector<2x64xf32>
    %552 = arith.maximumf %550, %551 : vector<2x64xf32>
    %553 = arith.truncf %552 : vector<2x64xf32> to vector<2x64xbf16>
    %c1_54 = arith.constant 1 : index
    %c0_55 = arith.constant 0 : index
    %c0_56 = arith.constant 0 : index
    %554 = vector.load %arg6[%c1_54, %c0_55, %c0_56] : memref<8x64x64xbf16, #tpu.memory_space<vmem>>, vector<1x64x64xbf16>
    %555 = vector.shape_cast %554 : vector<1x64x64xbf16> to vector<64x64xbf16>
    %cst_57 = arith.constant dense<0.000000e+00> : vector<2x64xf32>
    %556 = tpu.matmul %553, %555, %cst_57 {dimension_numbers = #tpu.dot_dimension_numbers<[1], [0], [0], [1], [0, 0, 1, 1], [], []>} : vector<2x64xbf16>, vector<64x64xbf16>, vector<2x64xf32> -> vector<2x64xf32>
    %557 = arith.addf %543, %556 : vector<2x64xf32>
    %c0_58 = arith.constant 0 : index
    %c256_59 = arith.constant 256 : index
    %558 = vector.load %arg11[%c0_58, %c256_59] : memref<2x1152xbf16, #tpu.memory_space<vmem>>, vector<2x256xbf16>
    %cst_60 = arith.constant dense<0.000000e+00> : vector<2x128xf32>
    %559 = tpu.matmul %558, %527, %cst_60 {dimension_numbers = #tpu.dot_dimension_numbers<[1], [0], [0], [1], [0, 0, 1, 1], [], []>} : vector<2x256xbf16>, vector<256x128xbf16>, vector<2x128xf32> -> vector<2x128xf32>
    %560 = vector.broadcast %528 : vector<1x128xf32> to vector<2x128xf32>
    %561 = arith.addf %559, %560 : vector<2x128xf32>
    %cst_61 = arith.constant 0.000000e+00 : f32
    %562 = vector.broadcast %cst_61 : f32 to vector<2x128xf32>
    %563 = arith.maximumf %561, %562 : vector<2x128xf32>
    %564 = vector.extract_strided_slice %563 {offsets = [0, 0], sizes = [2, 64], strides = [1, 1]} : vector<2x128xf32> to vector<2x64xf32>
    %565 = vector.extract_strided_slice %563 {offsets = [0, 64], sizes = [2, 64], strides = [1, 1]} : vector<2x128xf32> to vector<2x64xf32>
    %566 = arith.maximumf %564, %565 : vector<2x64xf32>
    %567 = arith.truncf %566 : vector<2x64xf32> to vector<2x64xbf16>
    %c2_62 = arith.constant 2 : index
    %c0_63 = arith.constant 0 : index
    %c0_64 = arith.constant 0 : index
    %568 = vector.load %arg6[%c2_62, %c0_63, %c0_64] : memref<8x64x64xbf16, #tpu.memory_space<vmem>>, vector<1x64x64xbf16>
    %569 = vector.shape_cast %568 : vector<1x64x64xbf16> to vector<64x64xbf16>
    %cst_65 = arith.constant dense<0.000000e+00> : vector<2x64xf32>
    %570 = tpu.matmul %567, %569, %cst_65 {dimension_numbers = #tpu.dot_dimension_numbers<[1], [0], [0], [1], [0, 0, 1, 1], [], []>} : vector<2x64xbf16>, vector<64x64xbf16>, vector<2x64xf32> -> vector<2x64xf32>
    %571 = arith.addf %557, %570 : vector<2x64xf32>
    %c0_66 = arith.constant 0 : index
    %c384_67 = arith.constant 384 : index
    %572 = vector.load %arg11[%c0_66, %c384_67] : memref<2x1152xbf16, #tpu.memory_space<vmem>>, vector<2x256xbf16>
    %cst_68 = arith.constant dense<0.000000e+00> : vector<2x128xf32>
    %573 = tpu.matmul %572, %527, %cst_68 {dimension_numbers = #tpu.dot_dimension_numbers<[1], [0], [0], [1], [0, 0, 1, 1], [], []>} : vector<2x256xbf16>, vector<256x128xbf16>, vector<2x128xf32> -> vector<2x128xf32>
    %574 = vector.broadcast %528 : vector<1x128xf32> to vector<2x128xf32>
    %575 = arith.addf %573, %574 : vector<2x128xf32>
    %cst_69 = arith.constant 0.000000e+00 : f32
    %576 = vector.broadcast %cst_69 : f32 to vector<2x128xf32>
    %577 = arith.maximumf %575, %576 : vector<2x128xf32>
    %578 = vector.extract_strided_slice %577 {offsets = [0, 0], sizes = [2, 64], strides = [1, 1]} : vector<2x128xf32> to vector<2x64xf32>
    %579 = vector.extract_strided_slice %577 {offsets = [0, 64], sizes = [2, 64], strides = [1, 1]} : vector<2x128xf32> to vector<2x64xf32>
    %580 = arith.maximumf %578, %579 : vector<2x64xf32>
    %581 = arith.truncf %580 : vector<2x64xf32> to vector<2x64xbf16>
    %c3 = arith.constant 3 : index
    %c0_70 = arith.constant 0 : index
    %c0_71 = arith.constant 0 : index
    %582 = vector.load %arg6[%c3, %c0_70, %c0_71] : memref<8x64x64xbf16, #tpu.memory_space<vmem>>, vector<1x64x64xbf16>
    %583 = vector.shape_cast %582 : vector<1x64x64xbf16> to vector<64x64xbf16>
    %cst_72 = arith.constant dense<0.000000e+00> : vector<2x64xf32>
    %584 = tpu.matmul %581, %583, %cst_72 {dimension_numbers = #tpu.dot_dimension_numbers<[1], [0], [0], [1], [0, 0, 1, 1], [], []>} : vector<2x64xbf16>, vector<64x64xbf16>, vector<2x64xf32> -> vector<2x64xf32>
    %585 = arith.addf %571, %584 : vector<2x64xf32>
    %c0_73 = arith.constant 0 : index
    %c512_74 = arith.constant 512 : index
    %586 = vector.load %arg11[%c0_73, %c512_74] : memref<2x1152xbf16, #tpu.memory_space<vmem>>, vector<2x256xbf16>
    %cst_75 = arith.constant dense<0.000000e+00> : vector<2x128xf32>
    %587 = tpu.matmul %586, %527, %cst_75 {dimension_numbers = #tpu.dot_dimension_numbers<[1], [0], [0], [1], [0, 0, 1, 1], [], []>} : vector<2x256xbf16>, vector<256x128xbf16>, vector<2x128xf32> -> vector<2x128xf32>
    %588 = vector.broadcast %528 : vector<1x128xf32> to vector<2x128xf32>
    %589 = arith.addf %587, %588 : vector<2x128xf32>
    %cst_76 = arith.constant 0.000000e+00 : f32
    %590 = vector.broadcast %cst_76 : f32 to vector<2x128xf32>
    %591 = arith.maximumf %589, %590 : vector<2x128xf32>
    %592 = vector.extract_strided_slice %591 {offsets = [0, 0], sizes = [2, 64], strides = [1, 1]} : vector<2x128xf32> to vector<2x64xf32>
    %593 = vector.extract_strided_slice %591 {offsets = [0, 64], sizes = [2, 64], strides = [1, 1]} : vector<2x128xf32> to vector<2x64xf32>
    %594 = arith.maximumf %592, %593 : vector<2x64xf32>
    %595 = arith.truncf %594 : vector<2x64xf32> to vector<2x64xbf16>
    %c4 = arith.constant 4 : index
    %c0_77 = arith.constant 0 : index
    %c0_78 = arith.constant 0 : index
    %596 = vector.load %arg6[%c4, %c0_77, %c0_78] : memref<8x64x64xbf16, #tpu.memory_space<vmem>>, vector<1x64x64xbf16>
    %597 = vector.shape_cast %596 : vector<1x64x64xbf16> to vector<64x64xbf16>
    %cst_79 = arith.constant dense<0.000000e+00> : vector<2x64xf32>
    %598 = tpu.matmul %595, %597, %cst_79 {dimension_numbers = #tpu.dot_dimension_numbers<[1], [0], [0], [1], [0, 0, 1, 1], [], []>} : vector<2x64xbf16>, vector<64x64xbf16>, vector<2x64xf32> -> vector<2x64xf32>
    %599 = arith.addf %585, %598 : vector<2x64xf32>
    %c0_80 = arith.constant 0 : index
    %c640_81 = arith.constant 640 : index
    %600 = vector.load %arg11[%c0_80, %c640_81] : memref<2x1152xbf16, #tpu.memory_space<vmem>>, vector<2x256xbf16>
    %cst_82 = arith.constant dense<0.000000e+00> : vector<2x128xf32>
    %601 = tpu.matmul %600, %527, %cst_82 {dimension_numbers = #tpu.dot_dimension_numbers<[1], [0], [0], [1], [0, 0, 1, 1], [], []>} : vector<2x256xbf16>, vector<256x128xbf16>, vector<2x128xf32> -> vector<2x128xf32>
    %602 = vector.broadcast %528 : vector<1x128xf32> to vector<2x128xf32>
    %603 = arith.addf %601, %602 : vector<2x128xf32>
    %cst_83 = arith.constant 0.000000e+00 : f32
    %604 = vector.broadcast %cst_83 : f32 to vector<2x128xf32>
    %605 = arith.maximumf %603, %604 : vector<2x128xf32>
    %606 = vector.extract_strided_slice %605 {offsets = [0, 0], sizes = [2, 64], strides = [1, 1]} : vector<2x128xf32> to vector<2x64xf32>
    %607 = vector.extract_strided_slice %605 {offsets = [0, 64], sizes = [2, 64], strides = [1, 1]} : vector<2x128xf32> to vector<2x64xf32>
    %608 = arith.maximumf %606, %607 : vector<2x64xf32>
    %609 = arith.truncf %608 : vector<2x64xf32> to vector<2x64xbf16>
    %c5 = arith.constant 5 : index
    %c0_84 = arith.constant 0 : index
    %c0_85 = arith.constant 0 : index
    %610 = vector.load %arg6[%c5, %c0_84, %c0_85] : memref<8x64x64xbf16, #tpu.memory_space<vmem>>, vector<1x64x64xbf16>
    %611 = vector.shape_cast %610 : vector<1x64x64xbf16> to vector<64x64xbf16>
    %cst_86 = arith.constant dense<0.000000e+00> : vector<2x64xf32>
    %612 = tpu.matmul %609, %611, %cst_86 {dimension_numbers = #tpu.dot_dimension_numbers<[1], [0], [0], [1], [0, 0, 1, 1], [], []>} : vector<2x64xbf16>, vector<64x64xbf16>, vector<2x64xf32> -> vector<2x64xf32>
    %613 = arith.addf %599, %612 : vector<2x64xf32>
    %c0_87 = arith.constant 0 : index
    %c768_88 = arith.constant 768 : index
    %614 = vector.load %arg11[%c0_87, %c768_88] : memref<2x1152xbf16, #tpu.memory_space<vmem>>, vector<2x256xbf16>
    %cst_89 = arith.constant dense<0.000000e+00> : vector<2x128xf32>
    %615 = tpu.matmul %614, %527, %cst_89 {dimension_numbers = #tpu.dot_dimension_numbers<[1], [0], [0], [1], [0, 0, 1, 1], [], []>} : vector<2x256xbf16>, vector<256x128xbf16>, vector<2x128xf32> -> vector<2x128xf32>
    %616 = vector.broadcast %528 : vector<1x128xf32> to vector<2x128xf32>
    %617 = arith.addf %615, %616 : vector<2x128xf32>
    %cst_90 = arith.constant 0.000000e+00 : f32
    %618 = vector.broadcast %cst_90 : f32 to vector<2x128xf32>
    %619 = arith.maximumf %617, %618 : vector<2x128xf32>
    %620 = vector.extract_strided_slice %619 {offsets = [0, 0], sizes = [2, 64], strides = [1, 1]} : vector<2x128xf32> to vector<2x64xf32>
    %621 = vector.extract_strided_slice %619 {offsets = [0, 64], sizes = [2, 64], strides = [1, 1]} : vector<2x128xf32> to vector<2x64xf32>
    %622 = arith.maximumf %620, %621 : vector<2x64xf32>
    %623 = arith.truncf %622 : vector<2x64xf32> to vector<2x64xbf16>
    %c6 = arith.constant 6 : index
    %c0_91 = arith.constant 0 : index
    %c0_92 = arith.constant 0 : index
    %624 = vector.load %arg6[%c6, %c0_91, %c0_92] : memref<8x64x64xbf16, #tpu.memory_space<vmem>>, vector<1x64x64xbf16>
    %625 = vector.shape_cast %624 : vector<1x64x64xbf16> to vector<64x64xbf16>
    %cst_93 = arith.constant dense<0.000000e+00> : vector<2x64xf32>
    %626 = tpu.matmul %623, %625, %cst_93 {dimension_numbers = #tpu.dot_dimension_numbers<[1], [0], [0], [1], [0, 0, 1, 1], [], []>} : vector<2x64xbf16>, vector<64x64xbf16>, vector<2x64xf32> -> vector<2x64xf32>
    %627 = arith.addf %613, %626 : vector<2x64xf32>
    %c0_94 = arith.constant 0 : index
    %c896_95 = arith.constant 896 : index
    %628 = vector.load %arg11[%c0_94, %c896_95] : memref<2x1152xbf16, #tpu.memory_space<vmem>>, vector<2x256xbf16>
    %cst_96 = arith.constant dense<0.000000e+00> : vector<2x128xf32>
    %629 = tpu.matmul %628, %527, %cst_96 {dimension_numbers = #tpu.dot_dimension_numbers<[1], [0], [0], [1], [0, 0, 1, 1], [], []>} : vector<2x256xbf16>, vector<256x128xbf16>, vector<2x128xf32> -> vector<2x128xf32>
    %630 = vector.broadcast %528 : vector<1x128xf32> to vector<2x128xf32>
    %631 = arith.addf %629, %630 : vector<2x128xf32>
    %cst_97 = arith.constant 0.000000e+00 : f32
    %632 = vector.broadcast %cst_97 : f32 to vector<2x128xf32>
    %633 = arith.maximumf %631, %632 : vector<2x128xf32>
    %634 = vector.extract_strided_slice %633 {offsets = [0, 0], sizes = [2, 64], strides = [1, 1]} : vector<2x128xf32> to vector<2x64xf32>
    %635 = vector.extract_strided_slice %633 {offsets = [0, 64], sizes = [2, 64], strides = [1, 1]} : vector<2x128xf32> to vector<2x64xf32>
    %636 = arith.maximumf %634, %635 : vector<2x64xf32>
    %637 = arith.truncf %636 : vector<2x64xf32> to vector<2x64xbf16>
    %c7 = arith.constant 7 : index
    %c0_98 = arith.constant 0 : index
    %c0_99 = arith.constant 0 : index
    %638 = vector.load %arg6[%c7, %c0_98, %c0_99] : memref<8x64x64xbf16, #tpu.memory_space<vmem>>, vector<1x64x64xbf16>
    %639 = vector.shape_cast %638 : vector<1x64x64xbf16> to vector<64x64xbf16>
    %cst_100 = arith.constant dense<0.000000e+00> : vector<2x64xf32>
    %640 = tpu.matmul %637, %639, %cst_100 {dimension_numbers = #tpu.dot_dimension_numbers<[1], [0], [0], [1], [0, 0, 1, 1], [], []>} : vector<2x64xbf16>, vector<64x64xbf16>, vector<2x64xf32> -> vector<2x64xf32>
    %641 = arith.addf %627, %640 : vector<2x64xf32>
    %c0_101 = arith.constant 0 : index
    %c0_102 = arith.constant 0 : index
    %642 = vector.load %arg7[%c0_101, %c0_102] : memref<1x64xf32, #tpu.memory_space<vmem>>, vector<1x64xf32>
    %643 = vector.broadcast %642 : vector<1x64xf32> to vector<2x64xf32>
    %644 = arith.addf %641, %643 : vector<2x64xf32>
    %cst_103 = arith.constant 0.000000e+00 : f32
    %645 = vector.broadcast %cst_103 : f32 to vector<2x64xf32>
    %646 = arith.maximumf %644, %645 : vector<2x64xf32>
    %c0_104 = arith.constant 0 : index
    %c0_105 = arith.constant 0 : index
    %647 = vector.load %arg8[%c0_104, %c0_105] : memref<1x64xf32, #tpu.memory_space<vmem>>, vector<1x64xf32>
    %648 = vector.broadcast %647 : vector<1x64xf32> to vector<2x64xf32>
    %649 = arith.mulf %646, %648 : vector<2x64xf32>
    %cst_106 = arith.constant dense<0.000000e+00> : vector<2xf32>
    %650 = vector.multi_reduction <add>, %649, %cst_106 [1] : vector<2x64xf32> to vector<2xf32>
    %651 = vector.shape_cast %650 : vector<2xf32> to vector<2x1xf32>
    %c0_107 = arith.constant 0 : index
    %c0_108 = arith.constant 0 : index
    %652 = vector.load %arg9[%c0_107, %c0_108] : memref<1x1xf32, #tpu.memory_space<vmem>>, vector<1x1xf32>
    %653 = vector.broadcast %652 : vector<1x1xf32> to vector<2x1xf32>
    %654 = arith.addf %651, %653 : vector<2x1xf32>
    %cst_109 = arith.constant 0.000000e+00 : f32
    %655 = vector.broadcast %cst_109 : f32 to vector<2x1xf32>
    %656 = arith.subf %655, %654 : vector<2x1xf32>
    %657 = math.exp %656 : vector<2x1xf32>
    %cst_110 = arith.constant 1.000000e+00 : f32
    %658 = vector.broadcast %cst_110 : f32 to vector<2x1xf32>
    %659 = arith.addf %658, %657 : vector<2x1xf32>
    %cst_111 = arith.constant 1.000000e+00 : f32
    %660 = vector.broadcast %cst_111 : f32 to vector<2x1xf32>
    %661 = arith.divf %660, %659 : vector<2x1xf32>
    %c0_112 = arith.constant 0 : index
    %c0_113 = arith.constant 0 : index
    %662 = vector.load %arg10[%c0_112, %c0_113] : memref<2x1xf32, #tpu.memory_space<vmem>>, vector<2x1xf32>
    tpu.vector_store %arg10[%c0_112, %c0_113], %661 {strides = array<i32>} : memref<2x1xf32, #tpu.memory_space<vmem>>, vector<2x1xf32>,
    return
  }
  func.func @transform_0(%arg0: i32) -> (i32, i32) {
    %c0_i32 = arith.constant 0 : i32
    %c0_i32_0 = arith.constant 0 : i32
    return %arg0, %c0_i32 : i32, i32
  }
  func.func @transform_1(%arg0: i32) -> (i32, i32, i32) {
    %c0_i32 = arith.constant 0 : i32
    %c0_i32_0 = arith.constant 0 : i32
    %c0_i32_1 = arith.constant 0 : i32
    %c0_i32_2 = arith.constant 0 : i32
    return %c0_i32, %c0_i32_0, %c0_i32_1 : i32, i32, i32
  }
  func.func @transform_2(%arg0: i32) -> (i32, i32) {
    %c0_i32 = arith.constant 0 : i32
    %c0_i32_0 = arith.constant 0 : i32
    %c0_i32_1 = arith.constant 0 : i32
    return %c0_i32, %c0_i32_0 : i32, i32
  }
  func.func @transform_3(%arg0: i32) -> (i32, i32) {
    %c0_i32 = arith.constant 0 : i32
    %c0_i32_0 = arith.constant 0 : i32
    %c0_i32_1 = arith.constant 0 : i32
    return %c0_i32, %c0_i32_0 : i32, i32
  }
  func.func @transform_4(%arg0: i32) -> (i32, i32) {
    %c0_i32 = arith.constant 0 : i32
    %c0_i32_0 = arith.constant 0 : i32
    %c0_i32_1 = arith.constant 0 : i32
    return %c0_i32, %c0_i32_0 : i32, i32
  }
  func.func @transform_5(%arg0: i32) -> (i32, i32, i32) {
    %c0_i32 = arith.constant 0 : i32
    %c0_i32_0 = arith.constant 0 : i32
    %c0_i32_1 = arith.constant 0 : i32
    %c0_i32_2 = arith.constant 0 : i32
    return %c0_i32, %c0_i32_0, %c0_i32_1 : i32, i32, i32
  }
  func.func @transform_6(%arg0: i32) -> (i32, i32) {
    %c0_i32 = arith.constant 0 : i32
    %c0_i32_0 = arith.constant 0 : i32
    %c0_i32_1 = arith.constant 0 : i32
    return %c0_i32, %c0_i32_0 : i32, i32
  }
  func.func @transform_7(%arg0: i32) -> (i32, i32) {
    %c0_i32 = arith.constant 0 : i32
    %c0_i32_0 = arith.constant 0 : i32
    %c0_i32_1 = arith.constant 0 : i32
    return %c0_i32, %c0_i32_0 : i32, i32
  }
  func.func @transform_8(%arg0: i32) -> (i32, i32) {
    %c0_i32 = arith.constant 0 : i32
    %c0_i32_0 = arith.constant 0 : i32
    %c0_i32_1 = arith.constant 0 : i32
    return %c0_i32, %c0_i32_0 : i32, i32
  }
  func.func @transform_9(%arg0: i32) -> (i32, i32) {
    %c0_i32 = arith.constant 0 : i32
    %c0_i32_0 = arith.constant 0 : i32
    return %arg0, %c0_i32 : i32, i32
  }
}

</mosaic_0001>

<llo_original>
// kernel: tpu_custom_call.1
$region0: #{tpu_custom_call.1}
  #allocation0 [shape = 'u32[]', space=smem, size = 0x4, offset = 0x4, fixed_abs, tag = 'smem constant byte address 0x4 - core index']
  #allocation1 [shape = 'u32[72,128]{1,0:T(1,128)}', space=vmem, size = 0x9000, scoped, tag = 'internal scratch']
  #allocation2 [shape = 'bf16[2,1152]{1,0:T(2,128)(2,1)}', space=vmem, size = 0x1200, scoped, tag = 'scratch operand']
  #allocation3 [shape = 'f32[1,1]{1,0:T(1,128)S(1)}', space=vmem, size = 0x200, scoped, tag = 'scoped memory for tpu_custom_call.1']
  %s0 = inlined_call_operand.vmem [shape: f32[2,40], index: 0, kind: input, shape index: {}]
  %s1 = inlined_call_operand.hbm [shape: f32[3,1,64], index: 1, kind: input, shape index: {}]
  %s2 = inlined_call_operand.vmem [shape: f32[1,64], index: 2, kind: input, shape index: {}]
  %s3 = inlined_call_operand.hbm [shape: bf16[256,128], index: 3, kind: input, shape index: {}]
  %s4 = inlined_call_operand.vmem [shape: f32[1,128], index: 4, kind: input, shape index: {}]
  %s5 = inlined_call_operand.hbm [shape: bf16[8,64,64], index: 5, kind: input, shape index: {}]
  %s6 = inlined_call_operand.vmem [shape: f32[1,64], index: 6, kind: input, shape index: {}]
  %s7 = inlined_call_operand.vmem [shape: f32[1,64], index: 7, kind: input, shape index: {}]
  %s8 = inlined_call_operand.<no memory space> [shape: f32[1,1], index: 8, kind: input, shape index: {}]
  %s9 = inlined_call_operand.vmem [shape: f32[2,1], index: 9, kind: output, shape index: {}]
  %s10 = sld [smem:[#allocation0]]
  $region58: #{tpu_custom_call.1} parent=0
    _
  %s12 = ssub.s32 1, %s10
  %s13 = scalar_select 0, %s12, %s10
  %v14 = vstv %s8
  %15 = vst [vmem:[#allocation3] sm:$0x1] %v14
  $region1: #{tpu_custom_call.1} parent=0
    #allocation4 [shape = 'u8[1536]{0}', space=vmem, size = 0x800, scoped, tag = 'input window, operand 1, single buffered']
    #allocation5 [shape = 's32[1]{0}', space=sflag, size = 0x4, scoped, tag = 'scoped memory for tpu_custom_call.1']
    #allocation6 [shape = 'u8[65536]{0}', space=vmem, size = 0x10000, scoped, tag = 'input window, operand 3, single buffered']
    #allocation7 [shape = 's32[1]{0}', space=sflag, size = 0x4, scoped, tag = 'scoped memory for tpu_custom_call.1']
    #allocation8 [shape = 'u8[131072]{0}', space=vmem, size = 0x20000, scoped, tag = 'input window, operand 5, single buffered']
    %16 = vsyncpa [#allocation5], 0
    %17 = vsyncpa [#allocation7], 0
    // Predicated region
    $region2: #{tpu_custom_call.1} parent=1 // pred_check
      _
    $region3: #{tpu_custom_call.1} parent=1 // pred_check_branch
      %19 = sbr.rel (0) target = $region5
    $region4: #{tpu_custom_call.1} parent=1 // pred_region
      _
    $region5: #{tpu_custom_call.1} parent=1 // pred_fallthru
      _
    // Predicated region
    $region6: #{tpu_custom_call.1} parent=1 // pred_check
      _
    $region7: #{tpu_custom_call.1} parent=1 // pred_check_branch
      %21 = sbr.rel (0) target = $region9
    $region8: #{tpu_custom_call.1} parent=1 // pred_region
      %23 = vsyncadd [#allocation5], 0
      %s24 = sshll.u32 %s1, 4
      %s25 = int_to_ptr.hbm [resolvable:$true] %s24
      %s26 = sshll.u32 [#allocation4], 4
      %s27 = int_to_ptr.vmem [resolvable:$true] %s26
      %32 = dma.hbm_to_vmem [thread:$0]  %s25, 48, %s27, [#allocation5], 16, 16, 1
    $region9: #{tpu_custom_call.1} parent=1 // pred_fallthru
      _
    // Predicated region
    $region10: #{tpu_custom_call.1} parent=1 // pred_check
      _
    $region11: #{tpu_custom_call.1} parent=1 // pred_check_branch
      %34 = sbr.rel (0) target = $region13
    $region12: #{tpu_custom_call.1} parent=1 // pred_region
      _
    $region13: #{tpu_custom_call.1} parent=1 // pred_fallthru
      _
    // Predicated region
    $region14: #{tpu_custom_call.1} parent=1 // pred_check
      _
    $region15: #{tpu_custom_call.1} parent=1 // pred_check_branch
      %36 = sbr.rel (0) target = $region17
    $region16: #{tpu_custom_call.1} parent=1 // pred_region
      %38 = vsyncadd [#allocation7], 0
      %s39 = sshll.u32 %s3, 4
      %s40 = int_to_ptr.hbm [resolvable:$true] %s39
      %s41 = sshll.u32 [#allocation6], 4
      %s42 = int_to_ptr.vmem [resolvable:$true] %s41
      %47 = dma.hbm_to_vmem [thread:$0]  %s40, 2048, %s42, [#allocation7], 64, 64, 4
    $region17: #{tpu_custom_call.1} parent=1 // pred_fallthru
      _
    // Predicated region
    $region18: #{tpu_custom_call.1} parent=1 // pred_check
      _
    $region19: #{tpu_custom_call.1} parent=1 // pred_check_branch
      %49 = sbr.rel (0) target = $region21
    $region20: #{tpu_custom_call.1} parent=1 // pred_region
      _
    $region21: #{tpu_custom_call.1} parent=1 // pred_fallthru
      _
    // Predicated region
    $region22: #{tpu_custom_call.1} parent=1 // pred_check
      _
    $region23: #{tpu_custom_call.1} parent=1 // pred_check_branch
      %51 = sbr.rel (0) target = $region25
    $region24: #{tpu_custom_call.1} parent=1 // pred_region
      %53 = vsyncadd [#allocation7], 0
      %s54 = sshll.u32 %s5, 4
      %s55 = int_to_ptr.hbm [resolvable:$true] %s54
      %s56 = sshll.u32 [#allocation8], 4
      %s57 = int_to_ptr.vmem [resolvable:$true] %s56
      %62 = dma.hbm_to_vmem [thread:$0]  %s55, 4096, %s57, [#allocation7], 64, 64, 4
    $region25: #{tpu_custom_call.1} parent=1 // pred_fallthru
      _
    // Predicated region
    $region26: #{tpu_custom_call.1} parent=1 // pred_check
      _
    $region27: #{tpu_custom_call.1} parent=1 // pred_check_branch
      %64 = sbr.rel (0) target = $region29
    $region28: #{tpu_custom_call.1} parent=1 // pred_region
      _
    $region29: #{tpu_custom_call.1} parent=1 // pred_fallthru
      _
    // Predicated region
    $region30: #{tpu_custom_call.1} parent=1 // pred_check
      _
    $region31: #{tpu_custom_call.1} parent=1 // pred_check_branch
      %66 = sbr.rel (0) target = $region33
    $region32: #{tpu_custom_call.1} parent=1 // pred_region
      _
    $region33: #{tpu_custom_call.1} parent=1 // pred_fallthru
      _
    // Predicated region
    $region34: #{tpu_custom_call.1} parent=1 // pred_check
      _
    $region35: #{tpu_custom_call.1} parent=1 // pred_check_branch
      %68 = sbr.rel (0) target = $region37
    $region36: #{tpu_custom_call.1} parent=1 // pred_region
      _
    $region37: #{tpu_custom_call.1} parent=1 // pred_fallthru
      _
    // Predicated region
    $region38: #{tpu_custom_call.1} parent=1 // pred_check
      _
    $region39: #{tpu_custom_call.1} parent=1 // pred_check_branch
      %70 = sbr.rel (0) target = $region41
    $region40: #{tpu_custom_call.1} parent=1 // pred_region
      %72 = dma.done [#allocation5], 48
    $region41: #{tpu_custom_call.1} parent=1 // pred_fallthru
      _
    // Predicated region
    $region42: #{tpu_custom_call.1} parent=1 // pred_check
      _
    $region43: #{tpu_custom_call.1} parent=1 // pred_check_branch
      %74 = sbr.rel (0) target = $region45
    $region44: #{tpu_custom_call.1} parent=1 // pred_region
      %76 = dma.done [#allocation7], 2048
    $region45: #{tpu_custom_call.1} parent=1 // pred_fallthru
      _
    // Predicated region
    $region46: #{tpu_custom_call.1} parent=1 // pred_check
      _
    $region47: #{tpu_custom_call.1} parent=1 // pred_check_branch
      %78 = sbr.rel (0) target = $region49
    $region48: #{tpu_custom_call.1} parent=1 // pred_region
      %80 = dma.done [#allocation7], 4096
    $region49: #{tpu_custom_call.1} parent=1 // pred_fallthru
      _
    %v82 = vld [vmem:[%s0] sm:$0x3]
    %v83 = vld [vmem:[%s2] sm:$0x1]
    %v84 = vld [vmem:[#allocation4] sm:$0x1]
    %s85 = scalar_lea.vmem [#allocation4], 1
    %v86 = vld [vmem:[%s85] sm:$0x1]
    %s87 = scalar_lea.vmem [#allocation4], 2
    %v88 = vld [vmem:[%s87] sm:$0x1]
    %90 = vset.pattern.permute.xlu0 0
    %91 = vperm.xlu0 %90, %v82
    %v92 = vpop.permute.xlu0 %91
    %v95 = vperm.slane %v84, 0
    %v97 = vmul.f32 %v92, %v95
    %98 = vset.pattern.permute.xlu0 1
    %99 = vperm.xlu0 %98, %v82
    %v100 = vpop.permute.xlu0 %99
    %v103 = vperm.slane %v86, 0
    %v105 = vmul.f32 %v100, %v103
    %v106 = vadd.f32 %v97, %v105
    %107 = vset.pattern.permute.xlu0 2
    %108 = vperm.xlu0 %107, %v82
    %v109 = vpop.permute.xlu0 %108
    %v112 = vperm.slane %v88, 0
    %v114 = vmul.f32 %v109, %v112
    %v115 = vadd.f32 %v106, %v114
    %v116 = vmul.f32 %v100, %v95
    %v117 = vmul.f32 %v109, %v103
    %v118 = vadd.f32 %v116, %v117
    %119 = vset.pattern.permute.xlu0 3
    %120 = vperm.xlu0 %119, %v82
    %v121 = vpop.permute.xlu0 %120
    %v123 = vmul.f32 %v121, %v112
    %v124 = vadd.f32 %v118, %v123
    %v125 = vmax.f32 %v115, %v124
    %v127 = vperm.slane %v83, 0
    %v129 = vadd.f32 %v125, %v127
    %v130 = vmax.f32 %v129, 0.0
    %v131 = vmul.f32 %v109, %v95
    %v132 = vmul.f32 %v121, %v103
    %v133 = vadd.f32 %v131, %v132
    %134 = vset.pattern.permute.xlu0 4
    %135 = vperm.xlu0 %134, %v82
    %v136 = vpop.permute.xlu0 %135
    %v138 = vmul.f32 %v136, %v112
    %v139 = vadd.f32 %v133, %v138
    %v140 = vmul.f32 %v121, %v95
    %v141 = vmul.f32 %v136, %v103
    %v142 = vadd.f32 %v140, %v141
    %143 = vset.pattern.permute.xlu0 5
    %144 = vperm.xlu0 %143, %v82
    %v145 = vpop.permute.xlu0 %144
    %v147 = vmul.f32 %v145, %v112
    %v148 = vadd.f32 %v142, %v147
    %v149 = vmax.f32 %v139, %v148
    %v150 = vadd.f32 %v149, %v127
    %v151 = vmax.f32 %v150, 0.0
    %153 = vrot.lane.b32.xlu0 %v151, 64
    %v154 = vpop.permute.xlu0 %153
    %vm156 = vcmask 523264
    %v157 = vsel %vm156, %v130, %v154
    %v158 = vpack.c.bf16 %v157, %v157
    %159 = vst [vmem:[#allocation2] sm:$0x1] %v158
    %v160 = vmul.f32 %v136, %v95
    %v161 = vmul.f32 %v145, %v103
    %v162 = vadd.f32 %v160, %v161
    %163 = vset.pattern.permute.xlu0 6
    %164 = vperm.xlu0 %163, %v82
    %v165 = vpop.permute.xlu0 %164
    %v167 = vmul.f32 %v165, %v112
    %v168 = vadd.f32 %v162, %v167
    %v169 = vmul.f32 %v145, %v95
    %v170 = vmul.f32 %v165, %v103
    %v171 = vadd.f32 %v169, %v170
    %172 = vset.pattern.permute.xlu0 7
    %173 = vperm.xlu0 %172, %v82
    %v174 = vpop.permute.xlu0 %173
    %v176 = vmul.f32 %v174, %v112
    %v177 = vadd.f32 %v171, %v176
    %v178 = vmax.f32 %v168, %v177
    %v179 = vadd.f32 %v178, %v127
    %v180 = vmax.f32 %v179, 0.0
    %v181 = vmul.f32 %v165, %v95
    %v182 = vmul.f32 %v174, %v103
    %v183 = vadd.f32 %v181, %v182
    %184 = vset.pattern.permute.xlu0 8
    %185 = vperm.xlu0 %184, %v82
    %v186 = vpop.permute.xlu0 %185
    %v188 = vmul.f32 %v186, %v112
    %v189 = vadd.f32 %v183, %v188
    %v190 = vmul.f32 %v174, %v95
    %v191 = vmul.f32 %v186, %v103
    %v192 = vadd.f32 %v190, %v191
    %193 = vset.pattern.permute.xlu0 9
    %194 = vperm.xlu0 %193, %v82
    %v195 = vpop.permute.xlu0 %194
    %v197 = vmul.f32 %v195, %v112
    %v198 = vadd.f32 %v192, %v197
    %v199 = vmax.f32 %v189, %v198
    %v200 = vadd.f32 %v199, %v127
    %v201 = vmax.f32 %v200, 0.0
    %203 = vrot.lane.b32.xlu0 %v201, 64
    %v204 = vpop.permute.xlu0 %203
    %v206 = vsel %vm156, %v180, %v204
    %v207 = vpack.c.bf16 %v206, %v206
    %208 = vst [vmem:[#allocation2 + $0x1] sm:$0x1] %v207
    %v209 = vmul.f32 %v186, %v95
    %v210 = vmul.f32 %v195, %v103
    %v211 = vadd.f32 %v209, %v210
    %212 = vset.pattern.permute.xlu0 10
    %213 = vperm.xlu0 %212, %v82
    %v214 = vpop.permute.xlu0 %213
    %v216 = vmul.f32 %v214, %v112
    %v217 = vadd.f32 %v211, %v216
    %v218 = vmul.f32 %v195, %v95
    %v219 = vmul.f32 %v214, %v103
    %v220 = vadd.f32 %v218, %v219
    %221 = vset.pattern.permute.xlu0 11
    %222 = vperm.xlu0 %221, %v82
    %v223 = vpop.permute.xlu0 %222
    %v225 = vmul.f32 %v223, %v112
    %v226 = vadd.f32 %v220, %v225
    %v227 = vmax.f32 %v217, %v226
    %v228 = vadd.f32 %v227, %v127
    %v229 = vmax.f32 %v228, 0.0
    %v230 = vmul.f32 %v214, %v95
    %v231 = vmul.f32 %v223, %v103
    %v232 = vadd.f32 %v230, %v231
    %233 = vset.pattern.permute.xlu0 12
    %234 = vperm.xlu0 %233, %v82
    %v235 = vpop.permute.xlu0 %234
    %v237 = vmul.f32 %v235, %v112
    %v238 = vadd.f32 %v232, %v237
    %v239 = vmul.f32 %v223, %v95
    %v240 = vmul.f32 %v235, %v103
    %v241 = vadd.f32 %v239, %v240
    %242 = vset.pattern.permute.xlu0 13
    %243 = vperm.xlu0 %242, %v82
    %v244 = vpop.permute.xlu0 %243
    %v246 = vmul.f32 %v244, %v112
    %v247 = vadd.f32 %v241, %v246
    %v248 = vmax.f32 %v238, %v247
    %v249 = vadd.f32 %v248, %v127
    %v250 = vmax.f32 %v249, 0.0
    %252 = vrot.lane.b32.xlu0 %v250, 64
    %v253 = vpop.permute.xlu0 %252
    %v255 = vsel %vm156, %v229, %v253
    %v256 = vpack.c.bf16 %v255, %v255
    %257 = vst [vmem:[#allocation2 + $0x2] sm:$0x1] %v256
    %v258 = vmul.f32 %v235, %v95
    %v259 = vmul.f32 %v244, %v103
    %v260 = vadd.f32 %v258, %v259
    %261 = vset.pattern.permute.xlu0 14
    %262 = vperm.xlu0 %261, %v82
    %v263 = vpop.permute.xlu0 %262
    %v265 = vmul.f32 %v263, %v112
    %v266 = vadd.f32 %v260, %v265
    %v267 = vmul.f32 %v244, %v95
    %v268 = vmul.f32 %v263, %v103
    %v269 = vadd.f32 %v267, %v268
    %270 = vset.pattern.permute.xlu0 15
    %271 = vperm.xlu0 %270, %v82
    %v272 = vpop.permute.xlu0 %271
    %v274 = vmul.f32 %v272, %v112
    %v275 = vadd.f32 %v269, %v274
    %v276 = vmax.f32 %v266, %v275
    %v277 = vadd.f32 %v276, %v127
    %v278 = vmax.f32 %v277, 0.0
    %v279 = vmul.f32 %v263, %v95
    %v280 = vmul.f32 %v272, %v103
    %v281 = vadd.f32 %v279, %v280
    %282 = vset.pattern.permute.xlu0 16
    %283 = vperm.xlu0 %282, %v82
    %v284 = vpop.permute.xlu0 %283
    %v286 = vmul.f32 %v284, %v112
    %v287 = vadd.f32 %v281, %v286
    %v288 = vmul.f32 %v272, %v95
    %v289 = vmul.f32 %v284, %v103
    %v290 = vadd.f32 %v288, %v289
    %291 = vset.pattern.permute.xlu0 17
    %292 = vperm.xlu0 %291, %v82
    %v293 = vpop.permute.xlu0 %292
    %v295 = vmul.f32 %v293, %v112
    %v296 = vadd.f32 %v290, %v295
    %v297 = vmax.f32 %v287, %v296
    %v298 = vadd.f32 %v297, %v127
    %v299 = vmax.f32 %v298, 0.0
    %301 = vrot.lane.b32.xlu0 %v299, 64
    %v302 = vpop.permute.xlu0 %301
    %v304 = vsel %vm156, %v278, %v302
    %v305 = vpack.c.bf16 %v304, %v304
    %306 = vst [vmem:[#allocation2 + $0x3] sm:$0x1] %v305
    %v307 = vmul.f32 %v284, %v95
    %v308 = vmul.f32 %v293, %v103
    %v309 = vadd.f32 %v307, %v308
    %310 = vset.pattern.permute.xlu0 18
    %311 = vperm.xlu0 %310, %v82
    %v312 = vpop.permute.xlu0 %311
    %v314 = vmul.f32 %v312, %v112
    %v315 = vadd.f32 %v309, %v314
    %v316 = vmul.f32 %v293, %v95
    %v317 = vmul.f32 %v312, %v103
    %v318 = vadd.f32 %v316, %v317
    %319 = vset.pattern.permute.xlu0 19
    %320 = vperm.xlu0 %319, %v82
    %v321 = vpop.permute.xlu0 %320
    %v323 = vmul.f32 %v321, %v112
    %v324 = vadd.f32 %v318, %v323
    %v325 = vmax.f32 %v315, %v324
    %v326 = vadd.f32 %v325, %v127
    %v327 = vmax.f32 %v326, 0.0
    %v328 = vmul.f32 %v312, %v95
    %v329 = vmul.f32 %v321, %v103
    %v330 = vadd.f32 %v328, %v329
    %331 = vset.pattern.permute.xlu0 20
    %332 = vperm.xlu0 %331, %v82
    %v333 = vpop.permute.xlu0 %332
    %v335 = vmul.f32 %v333, %v112
    %v336 = vadd.f32 %v330, %v335
    %v337 = vmul.f32 %v321, %v95
    %v338 = vmul.f32 %v333, %v103
    %v339 = vadd.f32 %v337, %v338
    %340 = vset.pattern.permute.xlu0 21
    %341 = vperm.xlu0 %340, %v82
    %v342 = vpop.permute.xlu0 %341
    %v344 = vmul.f32 %v342, %v112
    %v345 = vadd.f32 %v339, %v344
    %v346 = vmax.f32 %v336, %v345
    %v347 = vadd.f32 %v346, %v127
    %v348 = vmax.f32 %v347, 0.0
    %350 = vrot.lane.b32.xlu0 %v348, 64
    %v351 = vpop.permute.xlu0 %350
    %v353 = vsel %vm156, %v327, %v351
    %v354 = vpack.c.bf16 %v353, %v353
    %355 = vst [vmem:[#allocation2 + $0x4] sm:$0x1] %v354
    %v356 = vmul.f32 %v333, %v95
    %v357 = vmul.f32 %v342, %v103
    %v358 = vadd.f32 %v356, %v357
    %359 = vset.pattern.permute.xlu0 22
    %360 = vperm.xlu0 %359, %v82
    %v361 = vpop.permute.xlu0 %360
    %v363 = vmul.f32 %v361, %v112
    %v364 = vadd.f32 %v358, %v363
    %v365 = vmul.f32 %v342, %v95
    %v366 = vmul.f32 %v361, %v103
    %v367 = vadd.f32 %v365, %v366
    %368 = vset.pattern.permute.xlu0 23
    %369 = vperm.xlu0 %368, %v82
    %v370 = vpop.permute.xlu0 %369
    %v372 = vmul.f32 %v370, %v112
    %v373 = vadd.f32 %v367, %v372
    %v374 = vmax.f32 %v364, %v373
    %v375 = vadd.f32 %v374, %v127
    %v376 = vmax.f32 %v375, 0.0
    %v377 = vmul.f32 %v361, %v95
    %v378 = vmul.f32 %v370, %v103
    %v379 = vadd.f32 %v377, %v378
    %380 = vset.pattern.permute.xlu0 24
    %381 = vperm.xlu0 %380, %v82
    %v382 = vpop.permute.xlu0 %381
    %v384 = vmul.f32 %v382, %v112
    %v385 = vadd.f32 %v379, %v384
    %v386 = vmul.f32 %v370, %v95
    %v387 = vmul.f32 %v382, %v103
    %v388 = vadd.f32 %v386, %v387
    %389 = vset.pattern.permute.xlu0 25
    %390 = vperm.xlu0 %389, %v82
    %v391 = vpop.permute.xlu0 %390
    %v393 = vmul.f32 %v391, %v112
    %v394 = vadd.f32 %v388, %v393
    %v395 = vmax.f32 %v385, %v394
    %v396 = vadd.f32 %v395, %v127
    %v397 = vmax.f32 %v396, 0.0
    %399 = vrot.lane.b32.xlu0 %v397, 64
    %v400 = vpop.permute.xlu0 %399
    %v402 = vsel %vm156, %v376, %v400
    %v403 = vpack.c.bf16 %v402, %v402
    %404 = vst [vmem:[#allocation2 + $0x5] sm:$0x1] %v403
    %v405 = vmul.f32 %v382, %v95
    %v406 = vmul.f32 %v391, %v103
    %v407 = vadd.f32 %v405, %v406
    %408 = vset.pattern.permute.xlu0 26
    %409 = vperm.xlu0 %408, %v82
    %v410 = vpop.permute.xlu0 %409
    %v412 = vmul.f32 %v410, %v112
    %v413 = vadd.f32 %v407, %v412
    %v414 = vmul.f32 %v391, %v95
    %v415 = vmul.f32 %v410, %v103
    %v416 = vadd.f32 %v414, %v415
    %417 = vset.pattern.permute.xlu0 27
    %418 = vperm.xlu0 %417, %v82
    %v419 = vpop.permute.xlu0 %418
    %v421 = vmul.f32 %v419, %v112
    %v422 = vadd.f32 %v416, %v421
    %v423 = vmax.f32 %v413, %v422
    %v424 = vadd.f32 %v423, %v127
    %v425 = vmax.f32 %v424, 0.0
    %v426 = vmul.f32 %v410, %v95
    %v427 = vmul.f32 %v419, %v103
    %v428 = vadd.f32 %v426, %v427
    %429 = vset.pattern.permute.xlu0 28
    %430 = vperm.xlu0 %429, %v82
    %v431 = vpop.permute.xlu0 %430
    %v433 = vmul.f32 %v431, %v112
    %v434 = vadd.f32 %v428, %v433
    %v435 = vmul.f32 %v419, %v95
    %v436 = vmul.f32 %v431, %v103
    %v437 = vadd.f32 %v435, %v436
    %438 = vset.pattern.permute.xlu0 29
    %439 = vperm.xlu0 %438, %v82
    %v440 = vpop.permute.xlu0 %439
    %v442 = vmul.f32 %v440, %v112
    %v443 = vadd.f32 %v437, %v442
    %v444 = vmax.f32 %v434, %v443
    %v445 = vadd.f32 %v444, %v127
    %v446 = vmax.f32 %v445, 0.0
    %448 = vrot.lane.b32.xlu0 %v446, 64
    %v449 = vpop.permute.xlu0 %448
    %v451 = vsel %vm156, %v425, %v449
    %v452 = vpack.c.bf16 %v451, %v451
    %453 = vst [vmem:[#allocation2 + $0x6] sm:$0x1] %v452
    %v454 = vmul.f32 %v431, %v95
    %v455 = vmul.f32 %v440, %v103
    %v456 = vadd.f32 %v454, %v455
    %457 = vset.pattern.permute.xlu0 30
    %458 = vperm.xlu0 %457, %v82
    %v459 = vpop.permute.xlu0 %458
    %v461 = vmul.f32 %v459, %v112
    %v462 = vadd.f32 %v456, %v461
    %v463 = vmul.f32 %v440, %v95
    %v464 = vmul.f32 %v459, %v103
    %v465 = vadd.f32 %v463, %v464
    %466 = vset.pattern.permute.xlu0 31
    %467 = vperm.xlu0 %466, %v82
    %v468 = vpop.permute.xlu0 %467
    %v470 = vmul.f32 %v468, %v112
    %v471 = vadd.f32 %v465, %v470
    %v472 = vmax.f32 %v462, %v471
    %v473 = vadd.f32 %v472, %v127
    %v474 = vmax.f32 %v473, 0.0
    %v475 = vmul.f32 %v459, %v95
    %v476 = vmul.f32 %v468, %v103
    %v477 = vadd.f32 %v475, %v476
    %478 = vset.pattern.permute.xlu0 32
    %479 = vperm.xlu0 %478, %v82
    %v480 = vpop.permute.xlu0 %479
    %v482 = vmul.f32 %v480, %v112
    %v483 = vadd.f32 %v477, %v482
    %v484 = vmul.f32 %v468, %v95
    %v485 = vmul.f32 %v480, %v103
    %v486 = vadd.f32 %v484, %v485
    %487 = vset.pattern.permute.xlu0 33
    %488 = vperm.xlu0 %487, %v82
    %v489 = vpop.permute.xlu0 %488
    %v491 = vmul.f32 %v489, %v112
    %v492 = vadd.f32 %v486, %v491
    %v493 = vmax.f32 %v483, %v492
    %v494 = vadd.f32 %v493, %v127
    %v495 = vmax.f32 %v494, 0.0
    %497 = vrot.lane.b32.xlu0 %v495, 64
    %v498 = vpop.permute.xlu0 %497
    %v500 = vsel %vm156, %v474, %v498
    %v501 = vpack.c.bf16 %v500, %v500
    %502 = vst [vmem:[#allocation2 + $0x7] sm:$0x1] %v501
    %v503 = vmul.f32 %v480, %v95
    %v504 = vmul.f32 %v489, %v103
    %v505 = vadd.f32 %v503, %v504
    %506 = vset.pattern.permute.xlu0 34
    %507 = vperm.xlu0 %506, %v82
    %v508 = vpop.permute.xlu0 %507
    %v510 = vmul.f32 %v508, %v112
    %v511 = vadd.f32 %v505, %v510
    %v512 = vmul.f32 %v489, %v95
    %v513 = vmul.f32 %v508, %v103
    %v514 = vadd.f32 %v512, %v513
    %515 = vset.pattern.permute.xlu0 35
    %516 = vperm.xlu0 %515, %v82
    %v517 = vpop.permute.xlu0 %516
    %v519 = vmul.f32 %v517, %v112
    %v520 = vadd.f32 %v514, %v519
    %v521 = vmax.f32 %v511, %v520
    %v522 = vadd.f32 %v521, %v127
    %v523 = vmax.f32 %v522, 0.0
    %v524 = vmul.f32 %v508, %v95
    %v525 = vmul.f32 %v517, %v103
    %v526 = vadd.f32 %v524, %v525
    %527 = vset.pattern.permute.xlu0 36
    %528 = vperm.xlu0 %527, %v82
    %v529 = vpop.permute.xlu0 %528
    %v531 = vmul.f32 %v529, %v112
    %v532 = vadd.f32 %v526, %v531
    %v533 = vmul.f32 %v517, %v95
    %v534 = vmul.f32 %v529, %v103
    %v535 = vadd.f32 %v533, %v534
    %536 = vset.pattern.permute.xlu0 37
    %537 = vperm.xlu0 %536, %v82
    %v538 = vpop.permute.xlu0 %537
    %v540 = vmul.f32 %v538, %v112
    %v541 = vadd.f32 %v535, %v540
    %v542 = vmax.f32 %v532, %v541
    %v543 = vadd.f32 %v542, %v127
    %v544 = vmax.f32 %v543, 0.0
    %546 = vrot.lane.b32.xlu0 %v544, 64
    %v547 = vpop.permute.xlu0 %546
    %v549 = vsel %vm156, %v523, %v547
    %v550 = vpack.c.bf16 %v549, %v549
    %551 = vst [vmem:[#allocation2 + $0x8] sm:$0x1] %v550
    %v552 = vld [vmem:[#allocation6] sm:$0xf]
    %v553 = vld [vmem:[#allocation6 + $0x4] sm:$0xf]
    %v554 = vld [vmem:[#allocation6 + $0x8] sm:$0xf]
    %v555 = vld [vmem:[#allocation6 + $0xc] sm:$0xf]
    %v556 = vld [vmem:[#allocation6 + $0x10] sm:$0xf]
    %v557 = vld [vmem:[#allocation6 + $0x14] sm:$0xf]
    %v558 = vld [vmem:[#allocation6 + $0x18] sm:$0xf]
    %v559 = vld [vmem:[#allocation6 + $0x1c] sm:$0xf]
    %v560 = vld [vmem:[#allocation6 + $0x20] sm:$0xf]
    %v561 = vld [vmem:[#allocation6 + $0x24] sm:$0xf]
    %v562 = vld [vmem:[#allocation6 + $0x28] sm:$0xf]
    %v563 = vld [vmem:[#allocation6 + $0x2c] sm:$0xf]
    %v564 = vld [vmem:[#allocation6 + $0x30] sm:$0xf]
    %v565 = vld [vmem:[#allocation6 + $0x34] sm:$0xf]
    %v566 = vld [vmem:[#allocation6 + $0x38] sm:$0xf]
    %v567 = vld [vmem:[#allocation6 + $0x3c] sm:$0xf]
    %v568 = vld [vmem:[#allocation6 + $0x40] sm:$0xf]
    %v569 = vld [vmem:[#allocation6 + $0x44] sm:$0xf]
    %v570 = vld [vmem:[#allocation6 + $0x48] sm:$0xf]
    %v571 = vld [vmem:[#allocation6 + $0x4c] sm:$0xf]
    %v572 = vld [vmem:[#allocation6 + $0x50] sm:$0xf]
    %v573 = vld [vmem:[#allocation6 + $0x54] sm:$0xf]
    %v574 = vld [vmem:[#allocation6 + $0x58] sm:$0xf]
    %v575 = vld [vmem:[#allocation6 + $0x5c] sm:$0xf]
    %v576 = vld [vmem:[#allocation6 + $0x60] sm:$0xf]
    %v577 = vld [vmem:[#allocation6 + $0x64] sm:$0xf]
    %v578 = vld [vmem:[#allocation6 + $0x68] sm:$0xf]
    %v579 = vld [vmem:[#allocation6 + $0x6c] sm:$0xf]
    %v580 = vld [vmem:[#allocation6 + $0x70] sm:$0xf]
    %v581 = vld [vmem:[#allocation6 + $0x74] sm:$0xf]
    %v582 = vld [vmem:[#allocation6 + $0x78] sm:$0xf]
    %v583 = vld [vmem:[#allocation6 + $0x7c] sm:$0xf]
    %v584 = vld [vmem:[%s4] sm:$0x1]
    %v585 = vld [vmem:[#allocation2] sm:$0x3]
    %v587 = vperm.slane %v584, 0
    %590 = vst [vmem:[#allocation1] ss:$9 sm:$0xff] %v585
    %v591 = vld [vmem:[#allocation1] sm:$0xff]
    %v592 = vld [vmem:[#allocation1 + $0x9] sm:$0xff]
    %v627 = vunpack.c.l.b16 %v552
    %v628 = vunpack.c.l.b16 %v553
    %v629 = vunpack.c.l.b16 %v554
    %v630 = vunpack.c.l.b16 %v555
    %v631 = vunpack.c.l.b16 %v556
    %v632 = vunpack.c.l.b16 %v557
    %v633 = vunpack.c.l.b16 %v558
    %v634 = vunpack.c.l.b16 %v559
    %v635 = vunpack.c.l.b16 %v560
    %v636 = vunpack.c.l.b16 %v561
    %v637 = vunpack.c.l.b16 %v562
    %v638 = vunpack.c.l.b16 %v563
    %v639 = vunpack.c.l.b16 %v564
    %v640 = vunpack.c.l.b16 %v565
    %v641 = vunpack.c.l.b16 %v566
    %v642 = vunpack.c.l.b16 %v567
    %v643 = vunpack.c.l.b16 %v568
    %v644 = vunpack.c.l.b16 %v569
    %v645 = vunpack.c.l.b16 %v570
    %v646 = vunpack.c.l.b16 %v571
    %v647 = vunpack.c.l.b16 %v572
    %v648 = vunpack.c.l.b16 %v573
    %v649 = vunpack.c.l.b16 %v574
    %v650 = vunpack.c.l.b16 %v575
    %v651 = vunpack.c.l.b16 %v576
    %v652 = vunpack.c.l.b16 %v577
    %v653 = vunpack.c.l.b16 %v578
    %v654 = vunpack.c.l.b16 %v579
    %v655 = vunpack.c.l.b16 %v580
    %v656 = vunpack.c.l.b16 %v581
    %v657 = vunpack.c.l.b16 %v582
    %v658 = vunpack.c.l.b16 %v583
    %v659 = vpack.c.b16 %v628, %v627
    %v660 = vpack.c.b16 %v630, %v629
    %v661 = vpack.c.b16 %v632, %v631
    %v662 = vpack.c.b16 %v634, %v633
    %v663 = vpack.c.b16 %v636, %v635
    %v664 = vpack.c.b16 %v638, %v637
    %v665 = vpack.c.b16 %v640, %v639
    %v666 = vpack.c.b16 %v642, %v641
    %v667 = vpack.c.b16 %v644, %v643
    %v668 = vpack.c.b16 %v646, %v645
    %v669 = vpack.c.b16 %v648, %v647
    %v670 = vpack.c.b16 %v650, %v649
    %v671 = vpack.c.b16 %v652, %v651
    %v672 = vpack.c.b16 %v654, %v653
    %v673 = vpack.c.b16 %v656, %v655
    %v674 = vpack.c.b16 %v658, %v657
    %691 = vmatpush.bf16.msra.mxu0 %v666
    %692 = vmatpush.bf16.msra.mxu0 %v665
    %693 = vmatpush.bf16.msra.mxu0 %v664
    %694 = vmatpush.bf16.msra.mxu0 %v663
    %695 = vmatpush.bf16.msra.mxu0 %v662
    %696 = vmatpush.bf16.msra.mxu0 %v661
    %697 = vmatpush.bf16.msra.mxu0 %v660
    %698 = vmatpush.bf16.msra.mxu0 %v659
    %699 = vmatmul.bf16.gmra.mxu0 %v591
    %v700 = vpop.f32.mrf.mxu0
    %v701 = vadd.f32 %v587, %v700
    %v702 = vpop.f32.mrf.mxu0
    %703 = vdwg.mxu0
    %704 = vmatpush.bf16.msra.mxu0 %v674
    %705 = vmatpush.bf16.msra.mxu0 %v673
    %706 = vmatpush.bf16.msra.mxu0 %v672
    %707 = vmatpush.bf16.msra.mxu0 %v671
    %708 = vmatpush.bf16.msra.mxu0 %v670
    %709 = vmatpush.bf16.msra.mxu0 %v669
    %710 = vmatpush.bf16.msra.mxu0 %v668
    %711 = vmatpush.bf16.msra.mxu0 %v667
    %712 = vmatmul.bf16.gmra.mxu0 %v592
    %v713 = vpop.f32.mrf.mxu0
    %v714 = vadd.f32 %v701, %v713
    %v715 = vpop.f32.mrf.mxu0
    %716 = vdwg.mxu0
    %v717 = vmax.f32 %v714, 0.0
    %719 = vrot.lane.b32.xlu0 %v717, 64
    %v720 = vpop.permute.xlu0 %719
    %v722 = vmax.f32 %v717, %v720
    %v723 = vpack.c.bf16 %v722, %v722
    %v724 = vld [vmem:[#allocation8] sm:$0xf]
    %v725 = vld [vmem:[#allocation8 + $0x4] sm:$0xf]
    %v726 = vld [vmem:[#allocation8 + $0x8] sm:$0xf]
    %v727 = vld [vmem:[#allocation8 + $0xc] sm:$0xf]
    %v728 = vld [vmem:[#allocation8 + $0x10] sm:$0xf]
    %v729 = vld [vmem:[#allocation8 + $0x14] sm:$0xf]
    %v730 = vld [vmem:[#allocation8 + $0x18] sm:$0xf]
    %v731 = vld [vmem:[#allocation8 + $0x1c] sm:$0xf]
    %v732 = vld [vmem:[#allocation2 + $0x1] sm:$0x3]
    %734 = vst [vmem:[#allocation1] ss:$9 sm:$0xff] %v732
    %v735 = vld [vmem:[#allocation1] sm:$0xff]
    %v736 = vld [vmem:[#allocation1 + $0x9] sm:$0xff]
    %739 = vmatpush.bf16.msra.mxu0 %v666
    %740 = vmatpush.bf16.msra.mxu0 %v665
    %741 = vmatpush.bf16.msra.mxu0 %v664
    %742 = vmatpush.bf16.msra.mxu0 %v663
    %743 = vmatpush.bf16.msra.mxu0 %v662
    %744 = vmatpush.bf16.msra.mxu0 %v661
    %745 = vmatpush.bf16.msra.mxu0 %v660
    %746 = vmatpush.bf16.msra.mxu0 %v659
    %747 = vmatmul.bf16.gmra.mxu0 %v735
    %v748 = vpop.f32.mrf.mxu0
    %v749 = vadd.f32 %v587, %v748
    %v750 = vpop.f32.mrf.mxu0
    %751 = vdwg.mxu0
    %752 = vmatpush.bf16.msra.mxu0 %v674
    %753 = vmatpush.bf16.msra.mxu0 %v673
    %754 = vmatpush.bf16.msra.mxu0 %v672
    %755 = vmatpush.bf16.msra.mxu0 %v671
    %756 = vmatpush.bf16.msra.mxu0 %v670
    %757 = vmatpush.bf16.msra.mxu0 %v669
    %758 = vmatpush.bf16.msra.mxu0 %v668
    %759 = vmatpush.bf16.msra.mxu0 %v667
    %760 = vmatmul.bf16.gmra.mxu0 %v736
    %v761 = vpop.f32.mrf.mxu0
    %v762 = vadd.f32 %v749, %v761
    %v763 = vpop.f32.mrf.mxu0
    %764 = vdwg.mxu0
    %v765 = vmax.f32 %v762, 0.0
    %767 = vrot.lane.b32.xlu0 %v765, 64
    %v768 = vpop.permute.xlu0 %767
    %v770 = vmax.f32 %v765, %v768
    %v771 = vpack.c.bf16 %v770, %v770
    %s772 = scalar_lea.vmem [#allocation8], 32
    %v773 = vld [vmem:[%s772] sm:$0xf]
    %v774 = vld [vmem:[%s772 + $0x4] sm:$0xf]
    %v775 = vld [vmem:[%s772 + $0x8] sm:$0xf]
    %v776 = vld [vmem:[%s772 + $0xc] sm:$0xf]
    %v777 = vld [vmem:[%s772 + $0x10] sm:$0xf]
    %v778 = vld [vmem:[%s772 + $0x14] sm:$0xf]
    %v779 = vld [vmem:[%s772 + $0x18] sm:$0xf]
    %v780 = vld [vmem:[%s772 + $0x1c] sm:$0xf]
    %v789 = vunpack.c.l.b16 %v773
    %v790 = vunpack.c.l.b16 %v774
    %v791 = vunpack.c.l.b16 %v775
    %v792 = vunpack.c.l.b16 %v776
    %v793 = vunpack.c.l.b16 %v777
    %v794 = vunpack.c.l.b16 %v778
    %v795 = vunpack.c.l.b16 %v779
    %v796 = vunpack.c.l.b16 %v780
    %v797 = vpack.c.b16 %v790, %v789
    %v798 = vpack.c.b16 %v792, %v791
    %v799 = vpack.c.b16 %v794, %v793
    %v800 = vpack.c.b16 %v796, %v795
    %v806 = vsel %vm156, %v771, 0
    %808 = vmatpush.bf16.msra.mxu0 0
    %809 = vmatpush.bf16.msra.mxu0 0
    %810 = vmatpush.bf16.msra.mxu0 0
    %811 = vmatpush.bf16.msra.mxu0 0
    %812 = vmatpush.bf16.msra.mxu0 %v800
    %813 = vmatpush.bf16.msra.mxu0 %v799
    %814 = vmatpush.bf16.msra.mxu0 %v798
    %815 = vmatpush.bf16.msra.mxu0 %v797
    %816 = vmatmul.bf16.gmra.mxu0 %v806
    %v817 = vpop.f32.mrf.mxu0
    %v818 = vadd.f32 0.0, %v817
    %v819 = vpop.f32.mrf.mxu0
    %820 = vdwg.mxu0
    %v829 = vunpack.c.l.b16 %v724
    %v830 = vunpack.c.l.b16 %v725
    %v831 = vunpack.c.l.b16 %v726
    %v832 = vunpack.c.l.b16 %v727
    %v833 = vunpack.c.l.b16 %v728
    %v834 = vunpack.c.l.b16 %v729
    %v835 = vunpack.c.l.b16 %v730
    %v836 = vunpack.c.l.b16 %v731
    %v837 = vpack.c.b16 %v830, %v829
    %v838 = vpack.c.b16 %v832, %v831
    %v839 = vpack.c.b16 %v834, %v833
    %v840 = vpack.c.b16 %v836, %v835
    %v846 = vsel %vm156, %v723, 0
    %848 = vmatpush.bf16.msra.mxu0 0
    %849 = vmatpush.bf16.msra.mxu0 0
    %850 = vmatpush.bf16.msra.mxu0 0
    %851 = vmatpush.bf16.msra.mxu0 0
    %852 = vmatpush.bf16.msra.mxu0 %v840
    %853 = vmatpush.bf16.msra.mxu0 %v839
    %854 = vmatpush.bf16.msra.mxu0 %v838
    %855 = vmatpush.bf16.msra.mxu0 %v837
    %856 = vmatmul.bf16.gmra.mxu0 %v846
    %v857 = vpop.f32.mrf.mxu0
    %v858 = vadd.f32 %v818, %v857
    %v859 = vpop.f32.mrf.mxu0
    %860 = vdwg.mxu0
    %v861 = vld [vmem:[#allocation2 + $0x2] sm:$0x3]
    %863 = vst [vmem:[#allocation1] ss:$9 sm:$0xff] %v861
    %v864 = vld [vmem:[#allocation1] sm:$0xff]
    %v865 = vld [vmem:[#allocation1 + $0x9] sm:$0xff]
    %868 = vmatpush.bf16.msra.mxu0 %v666
    %869 = vmatpush.bf16.msra.mxu0 %v665
    %870 = vmatpush.bf16.msra.mxu0 %v664
    %871 = vmatpush.bf16.msra.mxu0 %v663
    %872 = vmatpush.bf16.msra.mxu0 %v662
    %873 = vmatpush.bf16.msra.mxu0 %v661
    %874 = vmatpush.bf16.msra.mxu0 %v660
    %875 = vmatpush.bf16.msra.mxu0 %v659
    %876 = vmatmul.bf16.gmra.mxu0 %v864
    %v877 = vpop.f32.mrf.mxu0
    %v878 = vadd.f32 %v587, %v877
    %v879 = vpop.f32.mrf.mxu0
    %880 = vdwg.mxu0
    %881 = vmatpush.bf16.msra.mxu0 %v674
    %882 = vmatpush.bf16.msra.mxu0 %v673
    %883 = vmatpush.bf16.msra.mxu0 %v672
    %884 = vmatpush.bf16.msra.mxu0 %v671
    %885 = vmatpush.bf16.msra.mxu0 %v670
    %886 = vmatpush.bf16.msra.mxu0 %v669
    %887 = vmatpush.bf16.msra.mxu0 %v668
    %888 = vmatpush.bf16.msra.mxu0 %v667
    %889 = vmatmul.bf16.gmra.mxu0 %v865
    %v890 = vpop.f32.mrf.mxu0
    %v891 = vadd.f32 %v878, %v890
    %v892 = vpop.f32.mrf.mxu0
    %893 = vdwg.mxu0
    %v894 = vmax.f32 %v891, 0.0
    %896 = vrot.lane.b32.xlu0 %v894, 64
    %v897 = vpop.permute.xlu0 %896
    %v899 = vmax.f32 %v894, %v897
    %v900 = vpack.c.bf16 %v899, %v899
    %s901 = scalar_lea.vmem [#allocation8], 64
    %v902 = vld [vmem:[%s901] sm:$0xf]
    %v903 = vld [vmem:[%s901 + $0x4] sm:$0xf]
    %v904 = vld [vmem:[%s901 + $0x8] sm:$0xf]
    %v905 = vld [vmem:[%s901 + $0xc] sm:$0xf]
    %v906 = vld [vmem:[%s901 + $0x10] sm:$0xf]
    %v907 = vld [vmem:[%s901 + $0x14] sm:$0xf]
    %v908 = vld [vmem:[%s901 + $0x18] sm:$0xf]
    %v909 = vld [vmem:[%s901 + $0x1c] sm:$0xf]
    %v918 = vunpack.c.l.b16 %v902
    %v919 = vunpack.c.l.b16 %v903
    %v920 = vunpack.c.l.b16 %v904
    %v921 = vunpack.c.l.b16 %v905
    %v922 = vunpack.c.l.b16 %v906
    %v923 = vunpack.c.l.b16 %v907
    %v924 = vunpack.c.l.b16 %v908
    %v925 = vunpack.c.l.b16 %v909
    %v926 = vpack.c.b16 %v919, %v918
    %v927 = vpack.c.b16 %v921, %v920
    %v928 = vpack.c.b16 %v923, %v922
    %v929 = vpack.c.b16 %v925, %v924
    %v935 = vsel %vm156, %v900, 0
    %937 = vmatpush.bf16.msra.mxu0 0
    %938 = vmatpush.bf16.msra.mxu0 0
    %939 = vmatpush.bf16.msra.mxu0 0
    %940 = vmatpush.bf16.msra.mxu0 0
    %941 = vmatpush.bf16.msra.mxu0 %v929
    %942 = vmatpush.bf16.msra.mxu0 %v928
    %943 = vmatpush.bf16.msra.mxu0 %v927
    %944 = vmatpush.bf16.msra.mxu0 %v926
    %945 = vmatmul.bf16.gmra.mxu0 %v935
    %v946 = vpop.f32.mrf.mxu0
    %v947 = vadd.f32 0.0, %v946
    %v948 = vpop.f32.mrf.mxu0
    %949 = vdwg.mxu0
    %v950 = vadd.f32 %v858, %v947
    %v951 = vld [vmem:[#allocation2 + $0x3] sm:$0x3]
    %953 = vst [vmem:[#allocation1] ss:$9 sm:$0xff] %v951
    %v954 = vld [vmem:[#allocation1] sm:$0xff]
    %v955 = vld [vmem:[#allocation1 + $0x9] sm:$0xff]
    %958 = vmatpush.bf16.msra.mxu0 %v666
    %959 = vmatpush.bf16.msra.mxu0 %v665
    %960 = vmatpush.bf16.msra.mxu0 %v664
    %961 = vmatpush.bf16.msra.mxu0 %v663
    %962 = vmatpush.bf16.msra.mxu0 %v662
    %963 = vmatpush.bf16.msra.mxu0 %v661
    %964 = vmatpush.bf16.msra.mxu0 %v660
    %965 = vmatpush.bf16.msra.mxu0 %v659
    %966 = vmatmul.bf16.gmra.mxu0 %v954
    %v967 = vpop.f32.mrf.mxu0
    %v968 = vadd.f32 %v587, %v967
    %v969 = vpop.f32.mrf.mxu0
    %970 = vdwg.mxu0
    %971 = vmatpush.bf16.msra.mxu0 %v674
    %972 = vmatpush.bf16.msra.mxu0 %v673
    %973 = vmatpush.bf16.msra.mxu0 %v672
    %974 = vmatpush.bf16.msra.mxu0 %v671
    %975 = vmatpush.bf16.msra.mxu0 %v670
    %976 = vmatpush.bf16.msra.mxu0 %v669
    %977 = vmatpush.bf16.msra.mxu0 %v668
    %978 = vmatpush.bf16.msra.mxu0 %v667
    %979 = vmatmul.bf16.gmra.mxu0 %v955
    %v980 = vpop.f32.mrf.mxu0
    %v981 = vadd.f32 %v968, %v980
    %v982 = vpop.f32.mrf.mxu0
    %983 = vdwg.mxu0
    %v984 = vmax.f32 %v981, 0.0
    %986 = vrot.lane.b32.xlu0 %v984, 64
    %v987 = vpop.permute.xlu0 %986
    %v989 = vmax.f32 %v984, %v987
    %v990 = vpack.c.bf16 %v989, %v989
    %s991 = scalar_lea.vmem [#allocation8], 96
    %v992 = vld [vmem:[%s991] sm:$0xf]
    %v993 = vld [vmem:[%s991 + $0x4] sm:$0xf]
    %v994 = vld [vmem:[%s991 + $0x8] sm:$0xf]
    %v995 = vld [vmem:[%s991 + $0xc] sm:$0xf]
    %v996 = vld [vmem:[%s991 + $0x10] sm:$0xf]
    %v997 = vld [vmem:[%s991 + $0x14] sm:$0xf]
    %v998 = vld [vmem:[%s991 + $0x18] sm:$0xf]
    %v999 = vld [vmem:[%s991 + $0x1c] sm:$0xf]
    %v1008 = vunpack.c.l.b16 %v992
    %v1009 = vunpack.c.l.b16 %v993
    %v1010 = vunpack.c.l.b16 %v994
    %v1011 = vunpack.c.l.b16 %v995
    %v1012 = vunpack.c.l.b16 %v996
    %v1013 = vunpack.c.l.b16 %v997
    %v1014 = vunpack.c.l.b16 %v998
    %v1015 = vunpack.c.l.b16 %v999
    %v1016 = vpack.c.b16 %v1009, %v1008
    %v1017 = vpack.c.b16 %v1011, %v1010
    %v1018 = vpack.c.b16 %v1013, %v1012
    %v1019 = vpack.c.b16 %v1015, %v1014
    %v1025 = vsel %vm156, %v990, 0
    %1027 = vmatpush.bf16.msra.mxu0 0
    %1028 = vmatpush.bf16.msra.mxu0 0
    %1029 = vmatpush.bf16.msra.mxu0 0
    %1030 = vmatpush.bf16.msra.mxu0 0
    %1031 = vmatpush.bf16.msra.mxu0 %v1019
    %1032 = vmatpush.bf16.msra.mxu0 %v1018
    %1033 = vmatpush.bf16.msra.mxu0 %v1017
    %1034 = vmatpush.bf16.msra.mxu0 %v1016
    %1035 = vmatmul.bf16.gmra.mxu0 %v1025
    %v1036 = vpop.f32.mrf.mxu0
    %v1037 = vadd.f32 0.0, %v1036
    %v1038 = vpop.f32.mrf.mxu0
    %1039 = vdwg.mxu0
    %v1040 = vadd.f32 %v950, %v1037
    %v1041 = vld [vmem:[#allocation2 + $0x4] sm:$0x3]
    %1043 = vst [vmem:[#allocation1] ss:$9 sm:$0xff] %v1041
    %v1044 = vld [vmem:[#allocation1] sm:$0xff]
    %v1045 = vld [vmem:[#allocation1 + $0x9] sm:$0xff]
    %1048 = vmatpush.bf16.msra.mxu0 %v666
    %1049 = vmatpush.bf16.msra.mxu0 %v665
    %1050 = vmatpush.bf16.msra.mxu0 %v664
    %1051 = vmatpush.bf16.msra.mxu0 %v663
    %1052 = vmatpush.bf16.msra.mxu0 %v662
    %1053 = vmatpush.bf16.msra.mxu0 %v661
    %1054 = vmatpush.bf16.msra.mxu0 %v660
    %1055 = vmatpush.bf16.msra.mxu0 %v659
    %1056 = vmatmul.bf16.gmra.mxu0 %v1044
    %v1057 = vpop.f32.mrf.mxu0
    %v1058 = vadd.f32 %v587, %v1057
    %v1059 = vpop.f32.mrf.mxu0
    %1060 = vdwg.mxu0
    %1061 = vmatpush.bf16.msra.mxu0 %v674
    %1062 = vmatpush.bf16.msra.mxu0 %v673
    %1063 = vmatpush.bf16.msra.mxu0 %v672
    %1064 = vmatpush.bf16.msra.mxu0 %v671
    %1065 = vmatpush.bf16.msra.mxu0 %v670
    %1066 = vmatpush.bf16.msra.mxu0 %v669
    %1067 = vmatpush.bf16.msra.mxu0 %v668
    %1068 = vmatpush.bf16.msra.mxu0 %v667
    %1069 = vmatmul.bf16.gmra.mxu0 %v1045
    %v1070 = vpop.f32.mrf.mxu0
    %v1071 = vadd.f32 %v1058, %v1070
    %v1072 = vpop.f32.mrf.mxu0
    %1073 = vdwg.mxu0
    %v1074 = vmax.f32 %v1071, 0.0
    %1076 = vrot.lane.b32.xlu0 %v1074, 64
    %v1077 = vpop.permute.xlu0 %1076
    %v1079 = vmax.f32 %v1074, %v1077
    %v1080 = vpack.c.bf16 %v1079, %v1079
    %s1081 = scalar_lea.vmem [#allocation8], 128
    %v1082 = vld [vmem:[%s1081] sm:$0xf]
    %v1083 = vld [vmem:[%s1081 + $0x4] sm:$0xf]
    %v1084 = vld [vmem:[%s1081 + $0x8] sm:$0xf]
    %v1085 = vld [vmem:[%s1081 + $0xc] sm:$0xf]
    %v1086 = vld [vmem:[%s1081 + $0x10] sm:$0xf]
    %v1087 = vld [vmem:[%s1081 + $0x14] sm:$0xf]
    %v1088 = vld [vmem:[%s1081 + $0x18] sm:$0xf]
    %v1089 = vld [vmem:[%s1081 + $0x1c] sm:$0xf]
    %v1098 = vunpack.c.l.b16 %v1082
    %v1099 = vunpack.c.l.b16 %v1083
    %v1100 = vunpack.c.l.b16 %v1084
    %v1101 = vunpack.c.l.b16 %v1085
    %v1102 = vunpack.c.l.b16 %v1086
    %v1103 = vunpack.c.l.b16 %v1087
    %v1104 = vunpack.c.l.b16 %v1088
    %v1105 = vunpack.c.l.b16 %v1089
    %v1106 = vpack.c.b16 %v1099, %v1098
    %v1107 = vpack.c.b16 %v1101, %v1100
    %v1108 = vpack.c.b16 %v1103, %v1102
    %v1109 = vpack.c.b16 %v1105, %v1104
    %v1115 = vsel %vm156, %v1080, 0
    %1117 = vmatpush.bf16.msra.mxu0 0
    %1118 = vmatpush.bf16.msra.mxu0 0
    %1119 = vmatpush.bf16.msra.mxu0 0
    %1120 = vmatpush.bf16.msra.mxu0 0
    %1121 = vmatpush.bf16.msra.mxu0 %v1109
    %1122 = vmatpush.bf16.msra.mxu0 %v1108
    %1123 = vmatpush.bf16.msra.mxu0 %v1107
    %1124 = vmatpush.bf16.msra.mxu0 %v1106
    %1125 = vmatmul.bf16.gmra.mxu0 %v1115
    %v1126 = vpop.f32.mrf.mxu0
    %v1127 = vadd.f32 0.0, %v1126
    %v1128 = vpop.f32.mrf.mxu0
    %1129 = vdwg.mxu0
    %v1130 = vadd.f32 %v1040, %v1127
    %v1131 = vld [vmem:[#allocation2 + $0x5] sm:$0x3]
    %1133 = vst [vmem:[#allocation1] ss:$9 sm:$0xff] %v1131
    %v1134 = vld [vmem:[#allocation1] sm:$0xff]
    %v1135 = vld [vmem:[#allocation1 + $0x9] sm:$0xff]
    %1138 = vmatpush.bf16.msra.mxu0 %v666
    %1139 = vmatpush.bf16.msra.mxu0 %v665
    %1140 = vmatpush.bf16.msra.mxu0 %v664
    %1141 = vmatpush.bf16.msra.mxu0 %v663
    %1142 = vmatpush.bf16.msra.mxu0 %v662
    %1143 = vmatpush.bf16.msra.mxu0 %v661
    %1144 = vmatpush.bf16.msra.mxu0 %v660
    %1145 = vmatpush.bf16.msra.mxu0 %v659
    %1146 = vmatmul.bf16.gmra.mxu0 %v1134
    %v1147 = vpop.f32.mrf.mxu0
    %v1148 = vadd.f32 %v587, %v1147
    %v1149 = vpop.f32.mrf.mxu0
    %1150 = vdwg.mxu0
    %1151 = vmatpush.bf16.msra.mxu0 %v674
    %1152 = vmatpush.bf16.msra.mxu0 %v673
    %1153 = vmatpush.bf16.msra.mxu0 %v672
    %1154 = vmatpush.bf16.msra.mxu0 %v671
    %1155 = vmatpush.bf16.msra.mxu0 %v670
    %1156 = vmatpush.bf16.msra.mxu0 %v669
    %1157 = vmatpush.bf16.msra.mxu0 %v668
    %1158 = vmatpush.bf16.msra.mxu0 %v667
    %1159 = vmatmul.bf16.gmra.mxu0 %v1135
    %v1160 = vpop.f32.mrf.mxu0
    %v1161 = vadd.f32 %v1148, %v1160
    %v1162 = vpop.f32.mrf.mxu0
    %1163 = vdwg.mxu0
    %v1164 = vmax.f32 %v1161, 0.0
    %1166 = vrot.lane.b32.xlu0 %v1164, 64
    %v1167 = vpop.permute.xlu0 %1166
    %v1169 = vmax.f32 %v1164, %v1167
    %v1170 = vpack.c.bf16 %v1169, %v1169
    %s1171 = scalar_lea.vmem [#allocation8], 160
    %v1172 = vld [vmem:[%s1171] sm:$0xf]
    %v1173 = vld [vmem:[%s1171 + $0x4] sm:$0xf]
    %v1174 = vld [vmem:[%s1171 + $0x8] sm:$0xf]
    %v1175 = vld [vmem:[%s1171 + $0xc] sm:$0xf]
    %v1176 = vld [vmem:[%s1171 + $0x10] sm:$0xf]
    %v1177 = vld [vmem:[%s1171 + $0x14] sm:$0xf]
    %v1178 = vld [vmem:[%s1171 + $0x18] sm:$0xf]
    %v1179 = vld [vmem:[%s1171 + $0x1c] sm:$0xf]
    %v1188 = vunpack.c.l.b16 %v1172
    %v1189 = vunpack.c.l.b16 %v1173
    %v1190 = vunpack.c.l.b16 %v1174
    %v1191 = vunpack.c.l.b16 %v1175
    %v1192 = vunpack.c.l.b16 %v1176
    %v1193 = vunpack.c.l.b16 %v1177
    %v1194 = vunpack.c.l.b16 %v1178
    %v1195 = vunpack.c.l.b16 %v1179
    %v1196 = vpack.c.b16 %v1189, %v1188
    %v1197 = vpack.c.b16 %v1191, %v1190
    %v1198 = vpack.c.b16 %v1193, %v1192
    %v1199 = vpack.c.b16 %v1195, %v1194
    %v1205 = vsel %vm156, %v1170, 0
    %1207 = vmatpush.bf16.msra.mxu0 0
    %1208 = vmatpush.bf16.msra.mxu0 0
    %1209 = vmatpush.bf16.msra.mxu0 0
    %1210 = vmatpush.bf16.msra.mxu0 0
    %1211 = vmatpush.bf16.msra.mxu0 %v1199
    %1212 = vmatpush.bf16.msra.mxu0 %v1198
    %1213 = vmatpush.bf16.msra.mxu0 %v1197
    %1214 = vmatpush.bf16.msra.mxu0 %v1196
    %1215 = vmatmul.bf16.gmra.mxu0 %v1205
    %v1216 = vpop.f32.mrf.mxu0
    %v1217 = vadd.f32 0.0, %v1216
    %v1218 = vpop.f32.mrf.mxu0
    %1219 = vdwg.mxu0
    %v1220 = vadd.f32 %v1130, %v1217
    %v1221 = vld [vmem:[#allocation2 + $0x6] sm:$0x3]
    %1223 = vst [vmem:[#allocation1] ss:$9 sm:$0xff] %v1221
    %v1224 = vld [vmem:[#allocation1] sm:$0xff]
    %v1225 = vld [vmem:[#allocation1 + $0x9] sm:$0xff]
    %1228 = vmatpush.bf16.msra.mxu0 %v666
    %1229 = vmatpush.bf16.msra.mxu0 %v665
    %1230 = vmatpush.bf16.msra.mxu0 %v664
    %1231 = vmatpush.bf16.msra.mxu0 %v663
    %1232 = vmatpush.bf16.msra.mxu0 %v662
    %1233 = vmatpush.bf16.msra.mxu0 %v661
    %1234 = vmatpush.bf16.msra.mxu0 %v660
    %1235 = vmatpush.bf16.msra.mxu0 %v659
    %1236 = vmatmul.bf16.gmra.mxu0 %v1224
    %v1237 = vpop.f32.mrf.mxu0
    %v1238 = vadd.f32 %v587, %v1237
    %v1239 = vpop.f32.mrf.mxu0
    %1240 = vdwg.mxu0
    %1241 = vmatpush.bf16.msra.mxu0 %v674
    %1242 = vmatpush.bf16.msra.mxu0 %v673
    %1243 = vmatpush.bf16.msra.mxu0 %v672
    %1244 = vmatpush.bf16.msra.mxu0 %v671
    %1245 = vmatpush.bf16.msra.mxu0 %v670
    %1246 = vmatpush.bf16.msra.mxu0 %v669
    %1247 = vmatpush.bf16.msra.mxu0 %v668
    %1248 = vmatpush.bf16.msra.mxu0 %v667
    %1249 = vmatmul.bf16.gmra.mxu0 %v1225
    %v1250 = vpop.f32.mrf.mxu0
    %v1251 = vadd.f32 %v1238, %v1250
    %v1252 = vpop.f32.mrf.mxu0
    %1253 = vdwg.mxu0
    %v1254 = vmax.f32 %v1251, 0.0
    %1256 = vrot.lane.b32.xlu0 %v1254, 64
    %v1257 = vpop.permute.xlu0 %1256
    %v1259 = vmax.f32 %v1254, %v1257
    %v1260 = vpack.c.bf16 %v1259, %v1259
    %s1261 = scalar_lea.vmem [#allocation8], 192
    %v1262 = vld [vmem:[%s1261] sm:$0xf]
    %v1263 = vld [vmem:[%s1261 + $0x4] sm:$0xf]
    %v1264 = vld [vmem:[%s1261 + $0x8] sm:$0xf]
    %v1265 = vld [vmem:[%s1261 + $0xc] sm:$0xf]
    %v1266 = vld [vmem:[%s1261 + $0x10] sm:$0xf]
    %v1267 = vld [vmem:[%s1261 + $0x14] sm:$0xf]
    %v1268 = vld [vmem:[%s1261 + $0x18] sm:$0xf]
    %v1269 = vld [vmem:[%s1261 + $0x1c] sm:$0xf]
    %v1278 = vunpack.c.l.b16 %v1262
    %v1279 = vunpack.c.l.b16 %v1263
    %v1280 = vunpack.c.l.b16 %v1264
    %v1281 = vunpack.c.l.b16 %v1265
    %v1282 = vunpack.c.l.b16 %v1266
    %v1283 = vunpack.c.l.b16 %v1267
    %v1284 = vunpack.c.l.b16 %v1268
    %v1285 = vunpack.c.l.b16 %v1269
    %v1286 = vpack.c.b16 %v1279, %v1278
    %v1287 = vpack.c.b16 %v1281, %v1280
    %v1288 = vpack.c.b16 %v1283, %v1282
    %v1289 = vpack.c.b16 %v1285, %v1284
    %v1295 = vsel %vm156, %v1260, 0
    %1297 = vmatpush.bf16.msra.mxu0 0
    %1298 = vmatpush.bf16.msra.mxu0 0
    %1299 = vmatpush.bf16.msra.mxu0 0
    %1300 = vmatpush.bf16.msra.mxu0 0
    %1301 = vmatpush.bf16.msra.mxu0 %v1289
    %1302 = vmatpush.bf16.msra.mxu0 %v1288
    %1303 = vmatpush.bf16.msra.mxu0 %v1287
    %1304 = vmatpush.bf16.msra.mxu0 %v1286
    %1305 = vmatmul.bf16.gmra.mxu0 %v1295
    %v1306 = vpop.f32.mrf.mxu0
    %v1307 = vadd.f32 0.0, %v1306
    %v1308 = vpop.f32.mrf.mxu0
    %1309 = vdwg.mxu0
    %v1310 = vadd.f32 %v1220, %v1307
    %v1311 = vld [vmem:[#allocation2 + $0x7] sm:$0x3]
    %1313 = vst [vmem:[#allocation1] ss:$9 sm:$0xff] %v1311
    %v1314 = vld [vmem:[#allocation1] sm:$0xff]
    %v1315 = vld [vmem:[#allocation1 + $0x9] sm:$0xff]
    %1318 = vmatpush.bf16.msra.mxu0 %v666
    %1319 = vmatpush.bf16.msra.mxu0 %v665
    %1320 = vmatpush.bf16.msra.mxu0 %v664
    %1321 = vmatpush.bf16.msra.mxu0 %v663
    %1322 = vmatpush.bf16.msra.mxu0 %v662
    %1323 = vmatpush.bf16.msra.mxu0 %v661
    %1324 = vmatpush.bf16.msra.mxu0 %v660
    %1325 = vmatpush.bf16.msra.mxu0 %v659
    %1326 = vmatmul.bf16.gmra.mxu0 %v1314
    %v1327 = vpop.f32.mrf.mxu0
    %v1328 = vadd.f32 %v587, %v1327
    %v1329 = vpop.f32.mrf.mxu0
    %1330 = vdwg.mxu0
    %1331 = vmatpush.bf16.msra.mxu0 %v674
    %1332 = vmatpush.bf16.msra.mxu0 %v673
    %1333 = vmatpush.bf16.msra.mxu0 %v672
    %1334 = vmatpush.bf16.msra.mxu0 %v671
    %1335 = vmatpush.bf16.msra.mxu0 %v670
    %1336 = vmatpush.bf16.msra.mxu0 %v669
    %1337 = vmatpush.bf16.msra.mxu0 %v668
    %1338 = vmatpush.bf16.msra.mxu0 %v667
    %1339 = vmatmul.bf16.gmra.mxu0 %v1315
    %v1340 = vpop.f32.mrf.mxu0
    %v1341 = vadd.f32 %v1328, %v1340
    %v1342 = vpop.f32.mrf.mxu0
    %1343 = vdwg.mxu0
    %v1344 = vmax.f32 %v1341, 0.0
    %1346 = vrot.lane.b32.xlu0 %v1344, 64
    %v1347 = vpop.permute.xlu0 %1346
    %v1349 = vmax.f32 %v1344, %v1347
    %v1350 = vpack.c.bf16 %v1349, %v1349
    %s1351 = scalar_lea.vmem [#allocation8], 224
    %v1352 = vld [vmem:[%s1351] sm:$0xf]
    %v1353 = vld [vmem:[%s1351 + $0x4] sm:$0xf]
    %v1354 = vld [vmem:[%s1351 + $0x8] sm:$0xf]
    %v1355 = vld [vmem:[%s1351 + $0xc] sm:$0xf]
    %v1356 = vld [vmem:[%s1351 + $0x10] sm:$0xf]
    %v1357 = vld [vmem:[%s1351 + $0x14] sm:$0xf]
    %v1358 = vld [vmem:[%s1351 + $0x18] sm:$0xf]
    %v1359 = vld [vmem:[%s1351 + $0x1c] sm:$0xf]
    %v1368 = vunpack.c.l.b16 %v1352
    %v1369 = vunpack.c.l.b16 %v1353
    %v1370 = vunpack.c.l.b16 %v1354
    %v1371 = vunpack.c.l.b16 %v1355
    %v1372 = vunpack.c.l.b16 %v1356
    %v1373 = vunpack.c.l.b16 %v1357
    %v1374 = vunpack.c.l.b16 %v1358
    %v1375 = vunpack.c.l.b16 %v1359
    %v1376 = vpack.c.b16 %v1369, %v1368
    %v1377 = vpack.c.b16 %v1371, %v1370
    %v1378 = vpack.c.b16 %v1373, %v1372
    %v1379 = vpack.c.b16 %v1375, %v1374
    %v1385 = vsel %vm156, %v1350, 0
    %1387 = vmatpush.bf16.msra.mxu0 0
    %1388 = vmatpush.bf16.msra.mxu0 0
    %1389 = vmatpush.bf16.msra.mxu0 0
    %1390 = vmatpush.bf16.msra.mxu0 0
    %1391 = vmatpush.bf16.msra.mxu0 %v1379
    %1392 = vmatpush.bf16.msra.mxu0 %v1378
    %1393 = vmatpush.bf16.msra.mxu0 %v1377
    %1394 = vmatpush.bf16.msra.mxu0 %v1376
    %1395 = vmatmul.bf16.gmra.mxu0 %v1385
    %v1396 = vpop.f32.mrf.mxu0
    %v1397 = vadd.f32 0.0, %v1396
    %v1398 = vpop.f32.mrf.mxu0
    %1399 = vdwg.mxu0
    %v1400 = vadd.f32 %v1310, %v1397
    %v1401 = vld [vmem:[%s6] sm:$0x1]
    %v1403 = vperm.slane %v1401, 0
    %v1405 = vadd.f32 %v1400, %v1403
    %v1406 = vmax.f32 %v1405, 0.0
    %v1407 = vld [vmem:[%s7] sm:$0x1]
    %v1409 = vperm.slane %v1407, 0
    %v1411 = vmul.f32 %v1406, %v1409
    %vm1412 = vcmask 517120
    %v1413 = vsel %vm1412, %v1411, 0.0
    %1414 = vadd.xlane.f32.xlu0 %v1413
    %v1415 = vpop.xlane.xlu0 %1414
    %v1416 = vld [vmem:[#allocation3] sm:$0x1]
    %v1418 = vperm.slane %v1416, 0
    %v1420 = vadd.f32 %v1415, %v1418
    %v1421 = vsub.f32 0.0, %v1420
    %v1422 = vmul.f32 %v1421, 1.442695
    %v1423 = vpow.pop %v1422
    %v1424 = vadd.f32 %v1423, 1.0
    %v1425 = vrcp.pop %v1424
    %v1426 = vmul.f32 %v1424, %v1425
    %v1427 = vsub.f32 1.0, %v1426
    %v1428 = vmul.f32 %v1425, %v1427
    %v1429 = vadd.f32 %v1425, %v1428
    %vm1430 = vweird.f32 %v1424
    %vm1431 = vweird.f32 %v1425
    %vm1432 = vmor %vm1430, %vm1431
    %v1433 = vsel %vm1432, %v1425, %v1429
    %v1434 = vand.u32 2147483647, %v1424
    %vm1435 = vcmp.eq.f32.partialorder %v1434, 8.507059e+37
    %v1436 = vand.u32 %v1424, 2147483648
    %v1437 = vor.u32 1.1754944e-38, %v1436
    %v1438 = vsel %vm1435, %v1437, %v1433
    %v1439 = vmul.f32 1.0, %v1438
    %vm1440 = vcmask 1024
    %1441 = vst.msk [vmem:[%s9] sm:$0x3] %vm1440, %v1439
    // Predicated region
    $region50: #{tpu_custom_call.1} parent=1 // pred_check
      _
    $region51: #{tpu_custom_call.1} parent=1 // pred_check_branch
      %1443 = sbr.rel (0) target = $region53
    $region52: #{tpu_custom_call.1} parent=1 // pred_region
      _
    $region53: #{tpu_custom_call.1} parent=1 // pred_fallthru
      _
    // Predicated region
    $region54: #{tpu_custom_call.1} parent=1 // pred_check
      _
    $region55: #{tpu_custom_call.1} parent=1 // pred_check_branch
      %1445 = sbr.rel (0) target = $region57
    $region56: #{tpu_custom_call.1} parent=1 // pred_region
      _
    $region57: #{tpu_custom_call.1} parent=1 // pred_fallthru
      _
    %1446 = vsyncpa [#allocation5], 1
    %1447 = vsyncpa [#allocation7], 1

</llo_original>
